<compile_context>
chip_gen: v6e
topology: v6e:2x2x1
jax: 0.10.0
libtpu: 0.0.40
codegen_flags: <defaults>
</compile_context>

<pallas_src>
import math
import functools

import jax
import jax.numpy as jnp
from jax import lax
from jax.experimental import pallas as pl
from jax.experimental.pallas import tpu as pltpu

LN_EPS = 1e-5
NEG_INF = -1e9


# ------------------------------ kernel helpers ------------------------------ #

def _layernorm(x, g, b):
    mu = jnp.mean(x, axis=-1, keepdims=True)
    var = jnp.mean(jnp.square(x - mu), axis=-1, keepdims=True)
    return (x - mu) * lax.rsqrt(var + LN_EPS) * g + b


def _gelu_tanh(y):
    # TODO(synk): HF Camembert uses exact erf-GELU; tanh approximation used here
    # (erf lowering is not guaranteed in Mosaic).
    c = math.sqrt(2.0 / math.pi)
    return 0.5 * y * (1.0 + jnp.tanh(c * (y + 0.044715 * y * y * y)))


# ------------------------------ fused encoder kernel ------------------------ #

def _encoder_kernel(h_emb_ref, bias_ref, emb_g_ref, emb_b_ref,
                    qkv_w_ref, qkv_b_ref, ao_w_ref, ao_b_ref,
                    a_ln_g_ref, a_ln_b_ref,
                    i_w_ref, i_b_ref, o_w_ref, o_b_ref,
                    o_ln_g_ref, o_ln_b_ref,
                    pooled_ref,
                    h_scratch,
                    *, rows, seq, heads, head_dim):
    """Grid = (batch_block, layer). k batch rows' (k*S, D) state lives in VMEM scratch."""
    layer = pl.program_id(1)
    n_layers = pl.num_programs(1)
    D = heads * head_dim
    R = rows * seq

    # Layer 0: apply the embedding LayerNorm and seed the resident hidden state.
    @pl.when(layer == 0)
    def _():
        h_scratch[...] = _layernorm(h_emb_ref[...], emb_g_ref[...], emb_b_ref[...])

    x = h_scratch[...]                         # (k*S, D) f32, resident across layers
    xb = x.astype(jnp.bfloat16)

    # ---- fused QKV projection: one MXU pass over a (D, 3D) weight.
    # NOTE: the 1/sqrt(head_dim) attention scale is pre-folded into the Q columns.
    qkv = jnp.dot(xb, qkv_w_ref[...], preferred_element_type=jnp.float32)
    qkv = qkv + qkv_b_ref[...]                 # (k*S, 3D) f32

    bias = bias_ref[...]                       # (k, 1, S) additive mask bias (0 / -1e9)

    # ---- self-attention: per head, per-row batched, accumulating directly into
    # the output projection (no lane-axis concat, bounded live set).
    attn_acc = ao_b_ref[...]                   # (1, D), broadcasts on first accumulate
    for h in range(heads):
        lo, hi = h * head_dim, (h + 1) * head_dim
        qh = qkv[:, lo:hi].reshape(rows, seq, head_dim).astype(jnp.bfloat16)
        kh = qkv[:, D + lo:D + hi].reshape(rows, seq, head_dim).astype(jnp.bfloat16)
        vh = qkv[:, 2 * D + lo:2 * D + hi].reshape(rows, seq, head_dim).astype(jnp.bfloat16)

        # scores per batch row: (k, S, S); rows never attend across each other.
        s = jnp.einsum('bqd,bkd->bqk', qh, kh, preferred_element_type=jnp.float32)
        s = s + bias
        s = s - jnp.max(s, axis=-1, keepdims=True)      # stable softmax (f32)
        p = jnp.exp(s)
        p = p * pl.reciprocal(jnp.sum(p, axis=-1, keepdims=True), approx=True)

        ctx_h = jnp.einsum('bqk,bkd->bqd', p.astype(jnp.bfloat16), vh,
                           preferred_element_type=jnp.float32)   # (k, S, dh)
        ctx_h = ctx_h.reshape(R, head_dim)
        # this head's slice of the output projection, accumulated in f32
        attn_acc = attn_acc + jnp.dot(ctx_h.astype(jnp.bfloat16),
                                      ao_w_ref[lo:hi, :],
                                      preferred_element_type=jnp.float32)

    # ---- fused residual + LayerNorm after attention ----
    h1 = _layernorm(attn_acc + x, a_ln_g_ref[...], a_ln_b_ref[...])

    # ---- FFN (GELU) + fused residual + LayerNorm ----
    inter = jnp.dot(h1.astype(jnp.bfloat16), i_w_ref[...],
                    preferred_element_type=jnp.float32) + i_b_ref[...]
    inter = _gelu_tanh(inter)
    ffn = jnp.dot(inter.astype(jnp.bfloat16), o_w_ref[...],
                  preferred_element_type=jnp.float32) + o_b_ref[...]
    h2 = _layernorm(ffn + h1, o_ln_g_ref[...], o_ln_b_ref[...])

    h_scratch[...] = h2                        # carry to next layer iteration

    # Fused mean pool over the sequence (torch.mean(hidden_states, dim=1), unmasked —
    # matches the reference module).  Only executed on the final layer iteration.
    @pl.when(layer == n_layers - 1)
    def _():
        pooled_ref[...] = jnp.mean(h2.reshape(rows, seq, D), axis=1, keepdims=True)


# ------------------------------ model wrapper -------------------------------- #

def init_params(key, *, vocab, max_pos, D, I, L, H):
    ks = iter(jax.random.split(key, 16))

    def nrm(shape):
        return 0.02 * jax.random.normal(next(ks), shape, jnp.float32)

    head_dim = D // H
    scale = 1.0 / math.sqrt(head_dim)

    word_emb = nrm((vocab, D))
    pos_emb = nrm((max_pos, D))
    type_emb = nrm((1, D))

    # Q/K/V fused into a single (D, 3D) weight; all layer weights stacked along a
    # leading L axis.  The 1/sqrt(head_dim) softmax scale is folded into the Q
    # projection columns (zero runtime cost in the kernel).
    qkv_w = nrm((L, D, 3 * D))
    qkv_w = qkv_w.at[:, :, :D].multiply(scale)
    qkv_b = jnp.zeros((L, 1, 3 * D), jnp.float32)
    qkv_b = qkv_b.at[:, :, :D].multiply(scale)

    return {
        "word_emb": word_emb,
        "pos_emb": pos_emb,
        "type_emb": type_emb,
        "emb_ln_g": jnp.ones((1, D), jnp.float32),
        "emb_ln_b": jnp.zeros((1, D), jnp.float32),
        # Matmul weights stored bf16 (MXU path); biases / LN params f32.
        "qkv_w": qkv_w.astype(jnp.bfloat16),
        "qkv_b": qkv_b,
        "ao_w": nrm((L, D, D)).astype(jnp.bfloat16),
        "ao_b": jnp.zeros((L, 1, D), jnp.float32),
        "a_ln_g": jnp.ones((L, 1, D), jnp.float32),
        "a_ln_b": jnp.zeros((L, 1, D), jnp.float32),
        "i_w": nrm((L, D, I)).astype(jnp.bfloat16),
        "i_b": jnp.zeros((L, 1, I), jnp.float32),
        "o_w": nrm((L, I, D)).astype(jnp.bfloat16),
        "o_b": jnp.zeros((L, 1, D), jnp.float32),
        "o_ln_g": jnp.ones((L, 1, D), jnp.float32),
        "o_ln_b": jnp.zeros((L, 1, D), jnp.float32),
    }


def bi_encoder_forward(params, input_ids, attention_mask, num_heads, rows_per_block=2):
    B, S = input_ids.shape
    D = params["word_emb"].shape[1]
    Dh = D // num_heads
    L = params["qkv_w"].shape[0]
    Lu = L - 1  # hidden_states[-2] -> the last encoder layer is dead work; skip it.
    assert Lu >= 1
    k = rows_per_block
    assert B % k == 0, "batch must be divisible by rows_per_block"

    mask_f = attention_mask.astype(jnp.float32)
    # RoBERTa/Camembert-style position ids (padding_idx = 1).
    # TODO(synk): HF derives these from (input_ids != padding_idx); the mask-derived
    # form is identical whenever the mask exactly marks non-pad tokens.
    position_ids = (jnp.cumsum(attention_mask, axis=1) * attention_mask + 1).astype(jnp.int32)

    # TODO(synk): embedding-table gathers stay in plain JAX (no worthwhile Pallas
    # gather path at this size); everything downstream is one fused Pallas kernel.
    emb = (params["word_emb"][input_ids]
           + params["pos_emb"][position_ids]
           + params["type_emb"][0][None, None, :])
    h_emb = emb.reshape(B * S, D).astype(jnp.float32)

    # Precompute the additive attention-mask bias once (0 for keep, -1e9 for pad).
    mask_bias = ((1.0 - mask_f) * NEG_INF).reshape(B, 1, S)

    layer_keys = ("qkv_w", "qkv_b", "ao_w", "ao_b", "a_ln_g", "a_ln_b",
                  "i_w", "i_b", "o_w", "o_b", "o_ln_g", "o_ln_b")
    layer_args = [params[name][:Lu] for name in layer_keys]  # only the Lu layers we run

    def wspec(a):
        # Per-layer weight block: leading (layer) dim squeezed, rest full-extent.
        return pl.BlockSpec((None,) + a.shape[1:], lambda b, l: (l, 0, 0))

    pooled = pl.pallas_call(
        functools.partial(_encoder_kernel, rows=k, seq=S, heads=num_heads, head_dim=Dh),
        out_shape=jax.ShapeDtypeStruct((B, 1, D), jnp.float32),
        grid=(B // k, Lu),
        in_specs=[
            pl.BlockSpec((k * S, D), lambda b, l: (b, 0)),     # h_emb: k batch rows per block
            pl.BlockSpec((k, 1, S), lambda b, l: (b, 0, 0)),   # mask bias for those rows
            pl.BlockSpec((1, D), lambda b, l: (0, 0)),         # emb LN gamma
            pl.BlockSpec((1, D), lambda b, l: (0, 0)),         # emb LN beta
        ] + [wspec(a) for a in layer_args],
        out_specs=pl.BlockSpec((k, 1, D), lambda b, l: (b, 0, 0)),
        scratch_shapes=[pltpu.VMEM((k * S, D), jnp.float32)],  # resident hidden state
        compiler_params=pltpu.CompilerParams(
            # batch-block axis is independent -> shard across TensorCores (v7x);
            # layer axis carries state in VMEM scratch -> arbitrary.
            dimension_semantics=("parallel", "arbitrary"),
            # Above v5e (16 MiB) / v6e (32 MiB) scoped defaults, below v7x's 64 MiB
            # physical VMEM.  TODO(synk): retune + add FFN I-tiling at real dims.
            vmem_limit_bytes=48 * 1024 * 1024,
        ),
    )(h_emb, mask_bias, params["emb_ln_g"], params["emb_ln_b"], *layer_args)

    return pooled.reshape(B, D)


# ----------------------------------- main ------------------------------------ #

if __name__ == "__main__":
    VOCAB, D, HEADS, FFN, LAYERS = 50, 32, 4, 64, 3
    B, S = 4, 8
    ROWS_PER_BLOCK = 2   # k batch rows per grid step; B//k = 2 keeps the parallel extent even

    key = jax.random.PRNGKey(0)
    pkey, dkey = jax.random.split(key)

    params = init_params(pkey, vocab=VOCAB, max_pos=S + 4, D=D, I=FFN, L=LAYERS, H=HEADS)

    input_ids = jax.random.randint(dkey, (B, S), 0, VOCAB, dtype=jnp.int32)
    attention_mask = jnp.ones((B, S), dtype=jnp.int32)
    attention_mask = attention_mask.at[1, 6:].set(0)  # exercise padding mask
    attention_mask = attention_mask.at[3, 5:].set(0)

    pooled = bi_encoder_forward(params, input_ids, attention_mask,
                                num_heads=HEADS, rows_per_block=ROWS_PER_BLOCK)
    pooled = jax.block_until_ready(pooled)
    assert pooled.shape == (B, D) and pooled.dtype == jnp.float32
    assert bool(jnp.all(jnp.isfinite(pooled)))
    print("KERNEL_OK")
</pallas_src>

<mosaic_0001>
module attributes {stable_mosaic.version = 11 : i64} {
  func.func @_encoder_kernel(%arg0: i32, %arg1: i32, %arg2: memref<16x32xf32, #tpu.memory_space<vmem>>, %arg3: memref<2x1x8xf32, #tpu.memory_space<vmem>>, %arg4: memref<1x32xf32, #tpu.memory_space<vmem>>, %arg5: memref<1x32xf32, #tpu.memory_space<vmem>>, %arg6: memref<1x32x96xbf16, #tpu.memory_space<vmem>>, %arg7: memref<1x1x96xf32, #tpu.memory_space<vmem>>, %arg8: memref<1x32x32xbf16, #tpu.memory_space<vmem>>, %arg9: memref<1x1x32xf32, #tpu.memory_space<vmem>>, %arg10: memref<1x1x32xf32, #tpu.memory_space<vmem>>, %arg11: memref<1x1x32xf32, #tpu.memory_space<vmem>>, %arg12: memref<1x32x64xbf16, #tpu.memory_space<vmem>>, %arg13: memref<1x1x64xf32, #tpu.memory_space<vmem>>, %arg14: memref<1x64x32xbf16, #tpu.memory_space<vmem>>, %arg15: memref<1x1x32xf32, #tpu.memory_space<vmem>>, %arg16: memref<1x1x32xf32, #tpu.memory_space<vmem>>, %arg17: memref<1x1x32xf32, #tpu.memory_space<vmem>>, %arg18: memref<2x1x32xf32, #tpu.memory_space<vmem>>, %arg19: memref<16x32xf32, #tpu.memory_space<vmem>>) attributes {dimension_semantics = [#tpu.dimension_semantics<parallel>, #tpu.dimension_semantics<arbitrary>], iteration_bounds = array<i64: 2, 2>, scalar_prefetch = 0 : i64, scratch_operands = 1 : i64, tpu.core_type = #tpu.core_type<tc>, window_params = [{transform_indices = @transform_0, window_bounds = array<i64: 16, 32>}, {transform_indices = @transform_1, window_bounds = array<i64: 2, 1, 8>}, {pipeline_mode = #tpu.pipeline_mode<synchronous>, transform_indices = @transform_2, window_bounds = array<i64: 1, 32>}, {pipeline_mode = #tpu.pipeline_mode<synchronous>, transform_indices = @transform_3, window_bounds = array<i64: 1, 32>}, {transform_indices = @transform_4, window_bounds = array<i64: 1, 32, 96>}, {transform_indices = @transform_5, window_bounds = array<i64: 1, 1, 96>}, {transform_indices = @transform_6, window_bounds = array<i64: 1, 32, 32>}, {transform_indices = @transform_7, window_bounds = array<i64: 1, 1, 32>}, {transform_indices = @transform_8, window_bounds = array<i64: 1, 1, 32>}, {transform_indices = @transform_9, window_bounds = array<i64: 1, 1, 32>}, {transform_indices = @transform_10, window_bounds = array<i64: 1, 32, 64>}, {transform_indices = @transform_11, window_bounds = array<i64: 1, 1, 64>}, {transform_indices = @transform_12, window_bounds = array<i64: 1, 64, 32>}, {transform_indices = @transform_13, window_bounds = array<i64: 1, 1, 32>}, {transform_indices = @transform_14, window_bounds = array<i64: 1, 1, 32>}, {transform_indices = @transform_15, window_bounds = array<i64: 1, 1, 32>}, {transform_indices = @transform_16, window_bounds = array<i64: 2, 1, 32>}]} {
    %c0_i32 = arith.constant 0 : i32
    %0 = arith.cmpi eq, %arg1, %c0_i32 : i32
    %1 = arith.extui %0 : i1 to i32
    %c0_i32_0 = arith.constant 0 : i32
    %2 = arith.cmpi ne, %1, %c0_i32_0 : i32
    scf.if %2 {
      %c0_86 = arith.constant 0 : index
      %c0_87 = arith.constant 0 : index
      %223 = vector.load %arg2[%c0_86, %c0_87] : memref<16x32xf32, #tpu.memory_space<vmem>>, vector<16x32xf32>
      %c0_88 = arith.constant 0 : index
      %c0_89 = arith.constant 0 : index
      %224 = vector.load %arg4[%c0_88, %c0_89] : memref<1x32xf32, #tpu.memory_space<vmem>>, vector<1x32xf32>
      %c0_90 = arith.constant 0 : index
      %c0_91 = arith.constant 0 : index
      %225 = vector.load %arg5[%c0_90, %c0_91] : memref<1x32xf32, #tpu.memory_space<vmem>>, vector<1x32xf32>
      %cst_92 = arith.constant dense<0.000000e+00> : vector<16xf32>
      %226 = vector.multi_reduction <add>, %223, %cst_92 [1] : vector<16x32xf32> to vector<16xf32>
      %227 = vector.shape_cast %226 : vector<16xf32> to vector<16x1xf32>
      %cst_93 = arith.constant 3.200000e+01 : f32
      %228 = vector.broadcast %cst_93 : f32 to vector<16x1xf32>
      %229 = arith.divf %227, %228 : vector<16x1xf32>
      %230 = vector.broadcast %229 : vector<16x1xf32> to vector<16x32xf32>
      %231 = arith.subf %223, %230 : vector<16x32xf32>
      %232 = arith.mulf %231, %231 : vector<16x32xf32>
      %cst_94 = arith.constant dense<0.000000e+00> : vector<16xf32>
      %233 = vector.multi_reduction <add>, %232, %cst_94 [1] : vector<16x32xf32> to vector<16xf32>
      %234 = vector.shape_cast %233 : vector<16xf32> to vector<16x1xf32>
      %cst_95 = arith.constant 3.200000e+01 : f32
      %235 = vector.broadcast %cst_95 : f32 to vector<16x1xf32>
      %236 = arith.divf %234, %235 : vector<16x1xf32>
      %237 = vector.broadcast %229 : vector<16x1xf32> to vector<16x32xf32>
      %238 = arith.subf %223, %237 : vector<16x32xf32>
      %cst_96 = arith.constant 9.99999974E-6 : f32
      %239 = vector.broadcast %cst_96 : f32 to vector<16x1xf32>
      %240 = arith.addf %236, %239 : vector<16x1xf32>
      %241 = math.rsqrt %240 : vector<16x1xf32>
      %242 = vector.broadcast %241 : vector<16x1xf32> to vector<16x32xf32>
      %243 = arith.mulf %238, %242 : vector<16x32xf32>
      %244 = vector.broadcast %224 : vector<1x32xf32> to vector<16x32xf32>
      %245 = arith.mulf %243, %244 : vector<16x32xf32>
      %246 = vector.broadcast %225 : vector<1x32xf32> to vector<16x32xf32>
      %247 = arith.addf %245, %246 : vector<16x32xf32>
      %c0_97 = arith.constant 0 : index
      %c0_98 = arith.constant 0 : index
      %248 = vector.load %arg19[%c0_97, %c0_98] : memref<16x32xf32, #tpu.memory_space<vmem>>, vector<16x32xf32>
      tpu.vector_store %arg19[%c0_97, %c0_98], %247 {strides = array<i32>} : memref<16x32xf32, #tpu.memory_space<vmem>>, vector<16x32xf32>,
    } else {
    }
    %c0 = arith.constant 0 : index
    %c0_1 = arith.constant 0 : index
    %3 = vector.load %arg19[%c0, %c0_1] : memref<16x32xf32, #tpu.memory_space<vmem>>, vector<16x32xf32>
    %4 = arith.truncf %3 : vector<16x32xf32> to vector<16x32xbf16>
    %c0_2 = arith.constant 0 : index
    %c0_3 = arith.constant 0 : index
    %c0_4 = arith.constant 0 : index
    %5 = vector.load %arg6[%c0_2, %c0_3, %c0_4] : memref<1x32x96xbf16, #tpu.memory_space<vmem>>, vector<1x32x96xbf16>
    %6 = vector.shape_cast %5 : vector<1x32x96xbf16> to vector<32x96xbf16>
    %cst = arith.constant dense<0.000000e+00> : vector<16x96xf32>
    %7 = tpu.matmul %4, %6, %cst {dimension_numbers = #tpu.dot_dimension_numbers<[1], [0], [0], [1], [0, 0, 1, 1], [], []>} : vector<16x32xbf16>, vector<32x96xbf16>, vector<16x96xf32> -> vector<16x96xf32>
    %c0_5 = arith.constant 0 : index
    %c0_6 = arith.constant 0 : index
    %c0_7 = arith.constant 0 : index
    %8 = vector.load %arg7[%c0_5, %c0_6, %c0_7] : memref<1x1x96xf32, #tpu.memory_space<vmem>>, vector<1x1x96xf32>
    %9 = vector.shape_cast %8 : vector<1x1x96xf32> to vector<1x96xf32>
    %10 = vector.broadcast %9 : vector<1x96xf32> to vector<16x96xf32>
    %11 = arith.addf %7, %10 : vector<16x96xf32>
    %c0_8 = arith.constant 0 : index
    %c0_9 = arith.constant 0 : index
    %c0_10 = arith.constant 0 : index
    %12 = vector.load %arg3[%c0_8, %c0_9, %c0_10] : memref<2x1x8xf32, #tpu.memory_space<vmem>>, vector<2x1x8xf32>
    %c0_11 = arith.constant 0 : index
    %c0_12 = arith.constant 0 : index
    %c0_13 = arith.constant 0 : index
    %13 = vector.load %arg9[%c0_11, %c0_12, %c0_13] : memref<1x1x32xf32, #tpu.memory_space<vmem>>, vector<1x1x32xf32>
    %14 = vector.shape_cast %13 : vector<1x1x32xf32> to vector<1x32xf32>
    %15 = vector.extract_strided_slice %11 {offsets = [0, 0], sizes = [16, 8], strides = [1, 1]} : vector<16x96xf32> to vector<16x8xf32>
    %16 = vector.shape_cast %15 : vector<16x8xf32> to vector<2x8x8xf32>
    %17 = arith.truncf %16 : vector<2x8x8xf32> to vector<2x8x8xbf16>
    %18 = vector.extract_strided_slice %11 {offsets = [0, 32], sizes = [16, 8], strides = [1, 1]} : vector<16x96xf32> to vector<16x8xf32>
    %19 = vector.shape_cast %18 : vector<16x8xf32> to vector<2x8x8xf32>
    %20 = arith.truncf %19 : vector<2x8x8xf32> to vector<2x8x8xbf16>
    %21 = vector.extract_strided_slice %11 {offsets = [0, 64], sizes = [16, 8], strides = [1, 1]} : vector<16x96xf32> to vector<16x8xf32>
    %22 = vector.shape_cast %21 : vector<16x8xf32> to vector<2x8x8xf32>
    %23 = arith.truncf %22 : vector<2x8x8xf32> to vector<2x8x8xbf16>
    "tpu.trace_start"() <{level = 10 : i32, message = "bqd,bkd->bqk"}> : () -> ()
    %cst_14 = arith.constant dense<0.000000e+00> : vector<2x8x8xf32>
    %24 = tpu.matmul %17, %20, %cst_14 {dimension_numbers = #tpu.dot_dimension_numbers<[2], [2], [1], [1], [0, 0, 0, 1, 1, 1], [0], [0]>} : vector<2x8x8xbf16>, vector<2x8x8xbf16>, vector<2x8x8xf32> -> vector<2x8x8xf32>
    "tpu.trace_stop"() : () -> ()
    %25 = vector.broadcast %12 : vector<2x1x8xf32> to vector<2x8x8xf32>
    %26 = arith.addf %24, %25 : vector<2x8x8xf32>
    %cst_15 = arith.constant dense<0xFF800000> : vector<2x8xf32>
    %27 = vector.multi_reduction <maximumf>, %26, %cst_15 [2] : vector<2x8x8xf32> to vector<2x8xf32>
    %28 = vector.shape_cast %27 : vector<2x8xf32> to vector<2x8x1xf32>
    %29 = vector.broadcast %28 : vector<2x8x1xf32> to vector<2x8x8xf32>
    %30 = arith.subf %26, %29 : vector<2x8x8xf32>
    %31 = math.exp %30 : vector<2x8x8xf32>
    %cst_16 = arith.constant dense<0.000000e+00> : vector<2x8xf32>
    %32 = vector.multi_reduction <add>, %31, %cst_16 [2] : vector<2x8x8xf32> to vector<2x8xf32>
    %33 = vector.shape_cast %32 : vector<2x8xf32> to vector<2x8x1xf32>
    %34 = tpu.reciprocal %33 {approx = true} : vector<2x8x1xf32> -> vector<2x8x1xf32>
    %35 = vector.broadcast %34 : vector<2x8x1xf32> to vector<2x8x8xf32>
    %36 = arith.mulf %31, %35 : vector<2x8x8xf32>
    %37 = arith.truncf %36 : vector<2x8x8xf32> to vector<2x8x8xbf16>
    "tpu.trace_start"() <{level = 10 : i32, message = "bqk,bkd->bqd"}> : () -> ()
    %cst_17 = arith.constant dense<0.000000e+00> : vector<2x8x8xf32>
    %38 = tpu.matmul %37, %23, %cst_17 {dimension_numbers = #tpu.dot_dimension_numbers<[2], [1], [1], [2], [0, 0, 0, 1, 1, 2], [0], [0]>} : vector<2x8x8xbf16>, vector<2x8x8xbf16>, vector<2x8x8xf32> -> vector<2x8x8xf32>
    "tpu.trace_stop"() : () -> ()
    %39 = vector.shape_cast %38 : vector<2x8x8xf32> to vector<16x8xf32>
    %40 = arith.truncf %39 : vector<16x8xf32> to vector<16x8xbf16>
    %c0_18 = arith.constant 0 : index
    %c0_19 = arith.constant 0 : index
    %c0_20 = arith.constant 0 : index
    %41 = vector.load %arg8[%c0_18, %c0_19, %c0_20] : memref<1x32x32xbf16, #tpu.memory_space<vmem>>, vector<1x8x32xbf16>
    %42 = vector.shape_cast %41 : vector<1x8x32xbf16> to vector<8x32xbf16>
    %cst_21 = arith.constant dense<0.000000e+00> : vector<16x32xf32>
    %43 = tpu.matmul %40, %42, %cst_21 {dimension_numbers = #tpu.dot_dimension_numbers<[1], [0], [0], [1], [0, 0, 1, 1], [], []>} : vector<16x8xbf16>, vector<8x32xbf16>, vector<16x32xf32> -> vector<16x32xf32>
    %44 = vector.broadcast %14 : vector<1x32xf32> to vector<16x32xf32>
    %45 = arith.addf %44, %43 : vector<16x32xf32>
    %46 = vector.extract_strided_slice %11 {offsets = [0, 8], sizes = [16, 8], strides = [1, 1]} : vector<16x96xf32> to vector<16x8xf32>
    %47 = vector.shape_cast %46 : vector<16x8xf32> to vector<2x8x8xf32>
    %48 = arith.truncf %47 : vector<2x8x8xf32> to vector<2x8x8xbf16>
    %49 = vector.extract_strided_slice %11 {offsets = [0, 40], sizes = [16, 8], strides = [1, 1]} : vector<16x96xf32> to vector<16x8xf32>
    %50 = vector.shape_cast %49 : vector<16x8xf32> to vector<2x8x8xf32>
    %51 = arith.truncf %50 : vector<2x8x8xf32> to vector<2x8x8xbf16>
    %52 = vector.extract_strided_slice %11 {offsets = [0, 72], sizes = [16, 8], strides = [1, 1]} : vector<16x96xf32> to vector<16x8xf32>
    %53 = vector.shape_cast %52 : vector<16x8xf32> to vector<2x8x8xf32>
    %54 = arith.truncf %53 : vector<2x8x8xf32> to vector<2x8x8xbf16>
    "tpu.trace_start"() <{level = 10 : i32, message = "bqd,bkd->bqk"}> : () -> ()
    %cst_22 = arith.constant dense<0.000000e+00> : vector<2x8x8xf32>
    %55 = tpu.matmul %48, %51, %cst_22 {dimension_numbers = #tpu.dot_dimension_numbers<[2], [2], [1], [1], [0, 0, 0, 1, 1, 1], [0], [0]>} : vector<2x8x8xbf16>, vector<2x8x8xbf16>, vector<2x8x8xf32> -> vector<2x8x8xf32>
    "tpu.trace_stop"() : () -> ()
    %56 = vector.broadcast %12 : vector<2x1x8xf32> to vector<2x8x8xf32>
    %57 = arith.addf %55, %56 : vector<2x8x8xf32>
    %cst_23 = arith.constant dense<0xFF800000> : vector<2x8xf32>
    %58 = vector.multi_reduction <maximumf>, %57, %cst_23 [2] : vector<2x8x8xf32> to vector<2x8xf32>
    %59 = vector.shape_cast %58 : vector<2x8xf32> to vector<2x8x1xf32>
    %60 = vector.broadcast %59 : vector<2x8x1xf32> to vector<2x8x8xf32>
    %61 = arith.subf %57, %60 : vector<2x8x8xf32>
    %62 = math.exp %61 : vector<2x8x8xf32>
    %cst_24 = arith.constant dense<0.000000e+00> : vector<2x8xf32>
    %63 = vector.multi_reduction <add>, %62, %cst_24 [2] : vector<2x8x8xf32> to vector<2x8xf32>
    %64 = vector.shape_cast %63 : vector<2x8xf32> to vector<2x8x1xf32>
    %65 = tpu.reciprocal %64 {approx = true} : vector<2x8x1xf32> -> vector<2x8x1xf32>
    %66 = vector.broadcast %65 : vector<2x8x1xf32> to vector<2x8x8xf32>
    %67 = arith.mulf %62, %66 : vector<2x8x8xf32>
    %68 = arith.truncf %67 : vector<2x8x8xf32> to vector<2x8x8xbf16>
    "tpu.trace_start"() <{level = 10 : i32, message = "bqk,bkd->bqd"}> : () -> ()
    %cst_25 = arith.constant dense<0.000000e+00> : vector<2x8x8xf32>
    %69 = tpu.matmul %68, %54, %cst_25 {dimension_numbers = #tpu.dot_dimension_numbers<[2], [1], [1], [2], [0, 0, 0, 1, 1, 2], [0], [0]>} : vector<2x8x8xbf16>, vector<2x8x8xbf16>, vector<2x8x8xf32> -> vector<2x8x8xf32>
    "tpu.trace_stop"() : () -> ()
    %70 = vector.shape_cast %69 : vector<2x8x8xf32> to vector<16x8xf32>
    %71 = arith.truncf %70 : vector<16x8xf32> to vector<16x8xbf16>
    %c0_26 = arith.constant 0 : index
    %c8 = arith.constant 8 : index
    %c0_27 = arith.constant 0 : index
    %72 = vector.load %arg8[%c0_26, %c8, %c0_27] : memref<1x32x32xbf16, #tpu.memory_space<vmem>>, vector<1x8x32xbf16>
    %73 = vector.shape_cast %72 : vector<1x8x32xbf16> to vector<8x32xbf16>
    %cst_28 = arith.constant dense<0.000000e+00> : vector<16x32xf32>
    %74 = tpu.matmul %71, %73, %cst_28 {dimension_numbers = #tpu.dot_dimension_numbers<[1], [0], [0], [1], [0, 0, 1, 1], [], []>} : vector<16x8xbf16>, vector<8x32xbf16>, vector<16x32xf32> -> vector<16x32xf32>
    %75 = arith.addf %45, %74 : vector<16x32xf32>
    %76 = vector.extract_strided_slice %11 {offsets = [0, 16], sizes = [16, 8], strides = [1, 1]} : vector<16x96xf32> to vector<16x8xf32>
    %77 = vector.shape_cast %76 : vector<16x8xf32> to vector<2x8x8xf32>
    %78 = arith.truncf %77 : vector<2x8x8xf32> to vector<2x8x8xbf16>
    %79 = vector.extract_strided_slice %11 {offsets = [0, 48], sizes = [16, 8], strides = [1, 1]} : vector<16x96xf32> to vector<16x8xf32>
    %80 = vector.shape_cast %79 : vector<16x8xf32> to vector<2x8x8xf32>
    %81 = arith.truncf %80 : vector<2x8x8xf32> to vector<2x8x8xbf16>
    %82 = vector.extract_strided_slice %11 {offsets = [0, 80], sizes = [16, 8], strides = [1, 1]} : vector<16x96xf32> to vector<16x8xf32>
    %83 = vector.shape_cast %82 : vector<16x8xf32> to vector<2x8x8xf32>
    %84 = arith.truncf %83 : vector<2x8x8xf32> to vector<2x8x8xbf16>
    "tpu.trace_start"() <{level = 10 : i32, message = "bqd,bkd->bqk"}> : () -> ()
    %cst_29 = arith.constant dense<0.000000e+00> : vector<2x8x8xf32>
    %85 = tpu.matmul %78, %81, %cst_29 {dimension_numbers = #tpu.dot_dimension_numbers<[2], [2], [1], [1], [0, 0, 0, 1, 1, 1], [0], [0]>} : vector<2x8x8xbf16>, vector<2x8x8xbf16>, vector<2x8x8xf32> -> vector<2x8x8xf32>
    "tpu.trace_stop"() : () -> ()
    %86 = vector.broadcast %12 : vector<2x1x8xf32> to vector<2x8x8xf32>
    %87 = arith.addf %85, %86 : vector<2x8x8xf32>
    %cst_30 = arith.constant dense<0xFF800000> : vector<2x8xf32>
    %88 = vector.multi_reduction <maximumf>, %87, %cst_30 [2] : vector<2x8x8xf32> to vector<2x8xf32>
    %89 = vector.shape_cast %88 : vector<2x8xf32> to vector<2x8x1xf32>
    %90 = vector.broadcast %89 : vector<2x8x1xf32> to vector<2x8x8xf32>
    %91 = arith.subf %87, %90 : vector<2x8x8xf32>
    %92 = math.exp %91 : vector<2x8x8xf32>
    %cst_31 = arith.constant dense<0.000000e+00> : vector<2x8xf32>
    %93 = vector.multi_reduction <add>, %92, %cst_31 [2] : vector<2x8x8xf32> to vector<2x8xf32>
    %94 = vector.shape_cast %93 : vector<2x8xf32> to vector<2x8x1xf32>
    %95 = tpu.reciprocal %94 {approx = true} : vector<2x8x1xf32> -> vector<2x8x1xf32>
    %96 = vector.broadcast %95 : vector<2x8x1xf32> to vector<2x8x8xf32>
    %97 = arith.mulf %92, %96 : vector<2x8x8xf32>
    %98 = arith.truncf %97 : vector<2x8x8xf32> to vector<2x8x8xbf16>
    "tpu.trace_start"() <{level = 10 : i32, message = "bqk,bkd->bqd"}> : () -> ()
    %cst_32 = arith.constant dense<0.000000e+00> : vector<2x8x8xf32>
    %99 = tpu.matmul %98, %84, %cst_32 {dimension_numbers = #tpu.dot_dimension_numbers<[2], [1], [1], [2], [0, 0, 0, 1, 1, 2], [0], [0]>} : vector<2x8x8xbf16>, vector<2x8x8xbf16>, vector<2x8x8xf32> -> vector<2x8x8xf32>
    "tpu.trace_stop"() : () -> ()
    %100 = vector.shape_cast %99 : vector<2x8x8xf32> to vector<16x8xf32>
    %101 = arith.truncf %100 : vector<16x8xf32> to vector<16x8xbf16>
    %c0_33 = arith.constant 0 : index
    %c16 = arith.constant 16 : index
    %c0_34 = arith.constant 0 : index
    %102 = vector.load %arg8[%c0_33, %c16, %c0_34] : memref<1x32x32xbf16, #tpu.memory_space<vmem>>, vector<1x8x32xbf16>
    %103 = vector.shape_cast %102 : vector<1x8x32xbf16> to vector<8x32xbf16>
    %cst_35 = arith.constant dense<0.000000e+00> : vector<16x32xf32>
    %104 = tpu.matmul %101, %103, %cst_35 {dimension_numbers = #tpu.dot_dimension_numbers<[1], [0], [0], [1], [0, 0, 1, 1], [], []>} : vector<16x8xbf16>, vector<8x32xbf16>, vector<16x32xf32> -> vector<16x32xf32>
    %105 = arith.addf %75, %104 : vector<16x32xf32>
    %106 = vector.extract_strided_slice %11 {offsets = [0, 24], sizes = [16, 8], strides = [1, 1]} : vector<16x96xf32> to vector<16x8xf32>
    %107 = vector.shape_cast %106 : vector<16x8xf32> to vector<2x8x8xf32>
    %108 = arith.truncf %107 : vector<2x8x8xf32> to vector<2x8x8xbf16>
    %109 = vector.extract_strided_slice %11 {offsets = [0, 56], sizes = [16, 8], strides = [1, 1]} : vector<16x96xf32> to vector<16x8xf32>
    %110 = vector.shape_cast %109 : vector<16x8xf32> to vector<2x8x8xf32>
    %111 = arith.truncf %110 : vector<2x8x8xf32> to vector<2x8x8xbf16>
    %112 = vector.extract_strided_slice %11 {offsets = [0, 88], sizes = [16, 8], strides = [1, 1]} : vector<16x96xf32> to vector<16x8xf32>
    %113 = vector.shape_cast %112 : vector<16x8xf32> to vector<2x8x8xf32>
    %114 = arith.truncf %113 : vector<2x8x8xf32> to vector<2x8x8xbf16>
    "tpu.trace_start"() <{level = 10 : i32, message = "bqd,bkd->bqk"}> : () -> ()
    %cst_36 = arith.constant dense<0.000000e+00> : vector<2x8x8xf32>
    %115 = tpu.matmul %108, %111, %cst_36 {dimension_numbers = #tpu.dot_dimension_numbers<[2], [2], [1], [1], [0, 0, 0, 1, 1, 1], [0], [0]>} : vector<2x8x8xbf16>, vector<2x8x8xbf16>, vector<2x8x8xf32> -> vector<2x8x8xf32>
    "tpu.trace_stop"() : () -> ()
    %116 = vector.broadcast %12 : vector<2x1x8xf32> to vector<2x8x8xf32>
    %117 = arith.addf %115, %116 : vector<2x8x8xf32>
    %cst_37 = arith.constant dense<0xFF800000> : vector<2x8xf32>
    %118 = vector.multi_reduction <maximumf>, %117, %cst_37 [2] : vector<2x8x8xf32> to vector<2x8xf32>
    %119 = vector.shape_cast %118 : vector<2x8xf32> to vector<2x8x1xf32>
    %120 = vector.broadcast %119 : vector<2x8x1xf32> to vector<2x8x8xf32>
    %121 = arith.subf %117, %120 : vector<2x8x8xf32>
    %122 = math.exp %121 : vector<2x8x8xf32>
    %cst_38 = arith.constant dense<0.000000e+00> : vector<2x8xf32>
    %123 = vector.multi_reduction <add>, %122, %cst_38 [2] : vector<2x8x8xf32> to vector<2x8xf32>
    %124 = vector.shape_cast %123 : vector<2x8xf32> to vector<2x8x1xf32>
    %125 = tpu.reciprocal %124 {approx = true} : vector<2x8x1xf32> -> vector<2x8x1xf32>
    %126 = vector.broadcast %125 : vector<2x8x1xf32> to vector<2x8x8xf32>
    %127 = arith.mulf %122, %126 : vector<2x8x8xf32>
    %128 = arith.truncf %127 : vector<2x8x8xf32> to vector<2x8x8xbf16>
    "tpu.trace_start"() <{level = 10 : i32, message = "bqk,bkd->bqd"}> : () -> ()
    %cst_39 = arith.constant dense<0.000000e+00> : vector<2x8x8xf32>
    %129 = tpu.matmul %128, %114, %cst_39 {dimension_numbers = #tpu.dot_dimension_numbers<[2], [1], [1], [2], [0, 0, 0, 1, 1, 2], [0], [0]>} : vector<2x8x8xbf16>, vector<2x8x8xbf16>, vector<2x8x8xf32> -> vector<2x8x8xf32>
    "tpu.trace_stop"() : () -> ()
    %130 = vector.shape_cast %129 : vector<2x8x8xf32> to vector<16x8xf32>
    %131 = arith.truncf %130 : vector<16x8xf32> to vector<16x8xbf16>
    %c0_40 = arith.constant 0 : index
    %c24 = arith.constant 24 : index
    %c0_41 = arith.constant 0 : index
    %132 = vector.load %arg8[%c0_40, %c24, %c0_41] : memref<1x32x32xbf16, #tpu.memory_space<vmem>>, vector<1x8x32xbf16>
    %133 = vector.shape_cast %132 : vector<1x8x32xbf16> to vector<8x32xbf16>
    %cst_42 = arith.constant dense<0.000000e+00> : vector<16x32xf32>
    %134 = tpu.matmul %131, %133, %cst_42 {dimension_numbers = #tpu.dot_dimension_numbers<[1], [0], [0], [1], [0, 0, 1, 1], [], []>} : vector<16x8xbf16>, vector<8x32xbf16>, vector<16x32xf32> -> vector<16x32xf32>
    %135 = arith.addf %105, %134 : vector<16x32xf32>
    %136 = arith.addf %135, %3 : vector<16x32xf32>
    %c0_43 = arith.constant 0 : index
    %c0_44 = arith.constant 0 : index
    %c0_45 = arith.constant 0 : index
    %137 = vector.load %arg10[%c0_43, %c0_44, %c0_45] : memref<1x1x32xf32, #tpu.memory_space<vmem>>, vector<1x1x32xf32>
    %138 = vector.shape_cast %137 : vector<1x1x32xf32> to vector<1x32xf32>
    %c0_46 = arith.constant 0 : index
    %c0_47 = arith.constant 0 : index
    %c0_48 = arith.constant 0 : index
    %139 = vector.load %arg11[%c0_46, %c0_47, %c0_48] : memref<1x1x32xf32, #tpu.memory_space<vmem>>, vector<1x1x32xf32>
    %140 = vector.shape_cast %139 : vector<1x1x32xf32> to vector<1x32xf32>
    %cst_49 = arith.constant dense<0.000000e+00> : vector<16xf32>
    %141 = vector.multi_reduction <add>, %136, %cst_49 [1] : vector<16x32xf32> to vector<16xf32>
    %142 = vector.shape_cast %141 : vector<16xf32> to vector<16x1xf32>
    %cst_50 = arith.constant 3.200000e+01 : f32
    %143 = vector.broadcast %cst_50 : f32 to vector<16x1xf32>
    %144 = arith.divf %142, %143 : vector<16x1xf32>
    %145 = vector.broadcast %144 : vector<16x1xf32> to vector<16x32xf32>
    %146 = arith.subf %136, %145 : vector<16x32xf32>
    %147 = arith.mulf %146, %146 : vector<16x32xf32>
    %cst_51 = arith.constant dense<0.000000e+00> : vector<16xf32>
    %148 = vector.multi_reduction <add>, %147, %cst_51 [1] : vector<16x32xf32> to vector<16xf32>
    %149 = vector.shape_cast %148 : vector<16xf32> to vector<16x1xf32>
    %cst_52 = arith.constant 3.200000e+01 : f32
    %150 = vector.broadcast %cst_52 : f32 to vector<16x1xf32>
    %151 = arith.divf %149, %150 : vector<16x1xf32>
    %152 = vector.broadcast %144 : vector<16x1xf32> to vector<16x32xf32>
    %153 = arith.subf %136, %152 : vector<16x32xf32>
    %cst_53 = arith.constant 9.99999974E-6 : f32
    %154 = vector.broadcast %cst_53 : f32 to vector<16x1xf32>
    %155 = arith.addf %151, %154 : vector<16x1xf32>
    %156 = math.rsqrt %155 : vector<16x1xf32>
    %157 = vector.broadcast %156 : vector<16x1xf32> to vector<16x32xf32>
    %158 = arith.mulf %153, %157 : vector<16x32xf32>
    %159 = vector.broadcast %138 : vector<1x32xf32> to vector<16x32xf32>
    %160 = arith.mulf %158, %159 : vector<16x32xf32>
    %161 = vector.broadcast %140 : vector<1x32xf32> to vector<16x32xf32>
    %162 = arith.addf %160, %161 : vector<16x32xf32>
    %163 = arith.truncf %162 : vector<16x32xf32> to vector<16x32xbf16>
    %c0_54 = arith.constant 0 : index
    %c0_55 = arith.constant 0 : index
    %c0_56 = arith.constant 0 : index
    %164 = vector.load %arg12[%c0_54, %c0_55, %c0_56] : memref<1x32x64xbf16, #tpu.memory_space<vmem>>, vector<1x32x64xbf16>
    %165 = vector.shape_cast %164 : vector<1x32x64xbf16> to vector<32x64xbf16>
    %cst_57 = arith.constant dense<0.000000e+00> : vector<16x64xf32>
    %166 = tpu.matmul %163, %165, %cst_57 {dimension_numbers = #tpu.dot_dimension_numbers<[1], [0], [0], [1], [0, 0, 1, 1], [], []>} : vector<16x32xbf16>, vector<32x64xbf16>, vector<16x64xf32> -> vector<16x64xf32>
    %c0_58 = arith.constant 0 : index
    %c0_59 = arith.constant 0 : index
    %c0_60 = arith.constant 0 : index
    %167 = vector.load %arg13[%c0_58, %c0_59, %c0_60] : memref<1x1x64xf32, #tpu.memory_space<vmem>>, vector<1x1x64xf32>
    %168 = vector.shape_cast %167 : vector<1x1x64xf32> to vector<1x64xf32>
    %169 = vector.broadcast %168 : vector<1x64xf32> to vector<16x64xf32>
    %170 = arith.addf %166, %169 : vector<16x64xf32>
    %cst_61 = arith.constant 5.000000e-01 : f32
    %171 = vector.broadcast %cst_61 : f32 to vector<16x64xf32>
    %172 = arith.mulf %171, %170 : vector<16x64xf32>
    %cst_62 = arith.constant 4.471500e-02 : f32
    %173 = vector.broadcast %cst_62 : f32 to vector<16x64xf32>
    %174 = arith.mulf %173, %170 : vector<16x64xf32>
    %175 = arith.mulf %174, %170 : vector<16x64xf32>
    %176 = arith.mulf %175, %170 : vector<16x64xf32>
    %177 = arith.addf %170, %176 : vector<16x64xf32>
    %cst_63 = arith.constant 0.797884583 : f32
    %178 = vector.broadcast %cst_63 : f32 to vector<16x64xf32>
    %179 = arith.mulf %178, %177 : vector<16x64xf32>
    %180 = math.tanh %179 : vector<16x64xf32>
    %cst_64 = arith.constant 1.000000e+00 : f32
    %181 = vector.broadcast %cst_64 : f32 to vector<16x64xf32>
    %182 = arith.addf %181, %180 : vector<16x64xf32>
    %183 = arith.mulf %172, %182 : vector<16x64xf32>
    %184 = arith.truncf %183 : vector<16x64xf32> to vector<16x64xbf16>
    %c0_65 = arith.constant 0 : index
    %c0_66 = arith.constant 0 : index
    %c0_67 = arith.constant 0 : index
    %185 = vector.load %arg14[%c0_65, %c0_66, %c0_67] : memref<1x64x32xbf16, #tpu.memory_space<vmem>>, vector<1x64x32xbf16>
    %186 = vector.shape_cast %185 : vector<1x64x32xbf16> to vector<64x32xbf16>
    %cst_68 = arith.constant dense<0.000000e+00> : vector<16x32xf32>
    %187 = tpu.matmul %184, %186, %cst_68 {dimension_numbers = #tpu.dot_dimension_numbers<[1], [0], [0], [1], [0, 0, 1, 1], [], []>} : vector<16x64xbf16>, vector<64x32xbf16>, vector<16x32xf32> -> vector<16x32xf32>
    %c0_69 = arith.constant 0 : index
    %c0_70 = arith.constant 0 : index
    %c0_71 = arith.constant 0 : index
    %188 = vector.load %arg15[%c0_69, %c0_70, %c0_71] : memref<1x1x32xf32, #tpu.memory_space<vmem>>, vector<1x1x32xf32>
    %189 = vector.shape_cast %188 : vector<1x1x32xf32> to vector<1x32xf32>
    %190 = vector.broadcast %189 : vector<1x32xf32> to vector<16x32xf32>
    %191 = arith.addf %187, %190 : vector<16x32xf32>
    %192 = arith.addf %191, %162 : vector<16x32xf32>
    %c0_72 = arith.constant 0 : index
    %c0_73 = arith.constant 0 : index
    %c0_74 = arith.constant 0 : index
    %193 = vector.load %arg16[%c0_72, %c0_73, %c0_74] : memref<1x1x32xf32, #tpu.memory_space<vmem>>, vector<1x1x32xf32>
    %194 = vector.shape_cast %193 : vector<1x1x32xf32> to vector<1x32xf32>
    %c0_75 = arith.constant 0 : index
    %c0_76 = arith.constant 0 : index
    %c0_77 = arith.constant 0 : index
    %195 = vector.load %arg17[%c0_75, %c0_76, %c0_77] : memref<1x1x32xf32, #tpu.memory_space<vmem>>, vector<1x1x32xf32>
    %196 = vector.shape_cast %195 : vector<1x1x32xf32> to vector<1x32xf32>
    %cst_78 = arith.constant dense<0.000000e+00> : vector<16xf32>
    %197 = vector.multi_reduction <add>, %192, %cst_78 [1] : vector<16x32xf32> to vector<16xf32>
    %198 = vector.shape_cast %197 : vector<16xf32> to vector<16x1xf32>
    %cst_79 = arith.constant 3.200000e+01 : f32
    %199 = vector.broadcast %cst_79 : f32 to vector<16x1xf32>
    %200 = arith.divf %198, %199 : vector<16x1xf32>
    %201 = vector.broadcast %200 : vector<16x1xf32> to vector<16x32xf32>
    %202 = arith.subf %192, %201 : vector<16x32xf32>
    %203 = arith.mulf %202, %202 : vector<16x32xf32>
    %cst_80 = arith.constant dense<0.000000e+00> : vector<16xf32>
    %204 = vector.multi_reduction <add>, %203, %cst_80 [1] : vector<16x32xf32> to vector<16xf32>
    %205 = vector.shape_cast %204 : vector<16xf32> to vector<16x1xf32>
    %cst_81 = arith.constant 3.200000e+01 : f32
    %206 = vector.broadcast %cst_81 : f32 to vector<16x1xf32>
    %207 = arith.divf %205, %206 : vector<16x1xf32>
    %208 = vector.broadcast %200 : vector<16x1xf32> to vector<16x32xf32>
    %209 = arith.subf %192, %208 : vector<16x32xf32>
    %cst_82 = arith.constant 9.99999974E-6 : f32
    %210 = vector.broadcast %cst_82 : f32 to vector<16x1xf32>
    %211 = arith.addf %207, %210 : vector<16x1xf32>
    %212 = math.rsqrt %211 : vector<16x1xf32>
    %213 = vector.broadcast %212 : vector<16x1xf32> to vector<16x32xf32>
    %214 = arith.mulf %209, %213 : vector<16x32xf32>
    %215 = vector.broadcast %194 : vector<1x32xf32> to vector<16x32xf32>
    %216 = arith.mulf %214, %215 : vector<16x32xf32>
    %217 = vector.broadcast %196 : vector<1x32xf32> to vector<16x32xf32>
    %218 = arith.addf %216, %217 : vector<16x32xf32>
    %c0_83 = arith.constant 0 : index
    %c0_84 = arith.constant 0 : index
    %219 = vector.load %arg19[%c0_83, %c0_84] : memref<16x32xf32, #tpu.memory_space<vmem>>, vector<16x32xf32>
    tpu.vector_store %arg19[%c0_83, %c0_84], %218 {strides = array<i32>} : memref<16x32xf32, #tpu.memory_space<vmem>>, vector<16x32xf32>,
    %c1_i32 = arith.constant 1 : i32
    %220 = arith.cmpi eq, %arg1, %c1_i32 : i32
    %221 = arith.extui %220 : i1 to i32
    %c0_i32_85 = arith.constant 0 : i32
    %222 = arith.cmpi ne, %221, %c0_i32_85 : i32
    scf.if %222 {
      %223 = vector.shape_cast %218 : vector<16x32xf32> to vector<2x8x32xf32>
      %cst_86 = arith.constant dense<0.000000e+00> : vector<2x32xf32>
      %224 = vector.multi_reduction <add>, %223, %cst_86 [1] : vector<2x8x32xf32> to vector<2x32xf32>
      %225 = vector.shape_cast %224 : vector<2x32xf32> to vector<2x1x32xf32>
      %cst_87 = arith.constant 8.000000e+00 : f32
      %226 = vector.broadcast %cst_87 : f32 to vector<2x1x32xf32>
      %227 = arith.divf %225, %226 : vector<2x1x32xf32>
      %c0_88 = arith.constant 0 : index
      %c0_89 = arith.constant 0 : index
      %c0_90 = arith.constant 0 : index
      %228 = vector.load %arg18[%c0_88, %c0_89, %c0_90] : memref<2x1x32xf32, #tpu.memory_space<vmem>>, vector<2x1x32xf32>
      tpu.vector_store %arg18[%c0_88, %c0_89, %c0_90], %227 {strides = array<i32>} : memref<2x1x32xf32, #tpu.memory_space<vmem>>, vector<2x1x32xf32>,
    } else {
    }
    return
  }
  func.func @transform_0(%arg0: i32, %arg1: i32) -> (i32, i32) {
    %c0_i32 = arith.constant 0 : i32
    %c0_i32_0 = arith.constant 0 : i32
    return %arg0, %c0_i32 : i32, i32
  }
  func.func @transform_1(%arg0: i32, %arg1: i32) -> (i32, i32, i32) {
    %c0_i32 = arith.constant 0 : i32
    %c0_i32_0 = arith.constant 0 : i32
    %c0_i32_1 = arith.constant 0 : i32
    return %arg0, %c0_i32, %c0_i32_0 : i32, i32, i32
  }
  func.func @transform_2(%arg0: i32, %arg1: i32) -> (i32, i32) {
    %c0_i32 = arith.constant 0 : i32
    %c0_i32_0 = arith.constant 0 : i32
    %c0_i32_1 = arith.constant 0 : i32
    return %c0_i32, %c0_i32_0 : i32, i32
  }
  func.func @transform_3(%arg0: i32, %arg1: i32) -> (i32, i32) {
    %c0_i32 = arith.constant 0 : i32
    %c0_i32_0 = arith.constant 0 : i32
    %c0_i32_1 = arith.constant 0 : i32
    return %c0_i32, %c0_i32_0 : i32, i32
  }
  func.func @transform_4(%arg0: i32, %arg1: i32) -> (i32, i32, i32) {
    %c0_i32 = arith.constant 0 : i32
    %c0_i32_0 = arith.constant 0 : i32
    %c0_i32_1 = arith.constant 0 : i32
    return %arg1, %c0_i32, %c0_i32_0 : i32, i32, i32
  }
  func.func @transform_5(%arg0: i32, %arg1: i32) -> (i32, i32, i32) {
    %c0_i32 = arith.constant 0 : i32
    %c0_i32_0 = arith.constant 0 : i32
    %c0_i32_1 = arith.constant 0 : i32
    return %arg1, %c0_i32, %c0_i32_0 : i32, i32, i32
  }
  func.func @transform_6(%arg0: i32, %arg1: i32) -> (i32, i32, i32) {
    %c0_i32 = arith.constant 0 : i32
    %c0_i32_0 = arith.constant 0 : i32
    %c0_i32_1 = arith.constant 0 : i32
    return %arg1, %c0_i32, %c0_i32_0 : i32, i32, i32
  }
  func.func @transform_7(%arg0: i32, %arg1: i32) -> (i32, i32, i32) {
    %c0_i32 = arith.constant 0 : i32
    %c0_i32_0 = arith.constant 0 : i32
    %c0_i32_1 = arith.constant 0 : i32
    return %arg1, %c0_i32, %c0_i32_0 : i32, i32, i32
  }
  func.func @transform_8(%arg0: i32, %arg1: i32) -> (i32, i32, i32) {
    %c0_i32 = arith.constant 0 : i32
    %c0_i32_0 = arith.constant 0 : i32
    %c0_i32_1 = arith.constant 0 : i32
    return %arg1, %c0_i32, %c0_i32_0 : i32, i32, i32
  }
  func.func @transform_9(%arg0: i32, %arg1: i32) -> (i32, i32, i32) {
    %c0_i32 = arith.constant 0 : i32
    %c0_i32_0 = arith.constant 0 : i32
    %c0_i32_1 = arith.constant 0 : i32
    return %arg1, %c0_i32, %c0_i32_0 : i32, i32, i32
  }
  func.func @transform_10(%arg0: i32, %arg1: i32) -> (i32, i32, i32) {
    %c0_i32 = arith.constant 0 : i32
    %c0_i32_0 = arith.constant 0 : i32
    %c0_i32_1 = arith.constant 0 : i32
    return %arg1, %c0_i32, %c0_i32_0 : i32, i32, i32
  }
  func.func @transform_11(%arg0: i32, %arg1: i32) -> (i32, i32, i32) {
    %c0_i32 = arith.constant 0 : i32
    %c0_i32_0 = arith.constant 0 : i32
    %c0_i32_1 = arith.constant 0 : i32
    return %arg1, %c0_i32, %c0_i32_0 : i32, i32, i32
  }
  func.func @transform_12(%arg0: i32, %arg1: i32) -> (i32, i32, i32) {
    %c0_i32 = arith.constant 0 : i32
    %c0_i32_0 = arith.constant 0 : i32
    %c0_i32_1 = arith.constant 0 : i32
    return %arg1, %c0_i32, %c0_i32_0 : i32, i32, i32
  }
  func.func @transform_13(%arg0: i32, %arg1: i32) -> (i32, i32, i32) {
    %c0_i32 = arith.constant 0 : i32
    %c0_i32_0 = arith.constant 0 : i32
    %c0_i32_1 = arith.constant 0 : i32
    return %arg1, %c0_i32, %c0_i32_0 : i32, i32, i32
  }
  func.func @transform_14(%arg0: i32, %arg1: i32) -> (i32, i32, i32) {
    %c0_i32 = arith.constant 0 : i32
    %c0_i32_0 = arith.constant 0 : i32
    %c0_i32_1 = arith.constant 0 : i32
    return %arg1, %c0_i32, %c0_i32_0 : i32, i32, i32
  }
  func.func @transform_15(%arg0: i32, %arg1: i32) -> (i32, i32, i32) {
    %c0_i32 = arith.constant 0 : i32
    %c0_i32_0 = arith.constant 0 : i32
    %c0_i32_1 = arith.constant 0 : i32
    return %arg1, %c0_i32, %c0_i32_0 : i32, i32, i32
  }
  func.func @transform_16(%arg0: i32, %arg1: i32) -> (i32, i32, i32) {
    %c0_i32 = arith.constant 0 : i32
    %c0_i32_0 = arith.constant 0 : i32
    %c0_i32_1 = arith.constant 0 : i32
    return %arg0, %c0_i32, %c0_i32_0 : i32, i32, i32
  }
}

</mosaic_0001>

<llo_original>
// kernel: tpu_custom_call.1
$region0: #{tpu_custom_call.1}
  #allocation0 [shape = 'u32[]', space=smem, size = 0x4, offset = 0x4, fixed_abs, tag = 'smem constant byte address 0x4 - core index']
  #allocation1 [shape = 'u32[144,128]{1,0:T(1,128)}', space=vmem, size = 0x12000, scoped, tag = 'internal scratch']
  #allocation2 [shape = 'f32[16,32]{1,0:T(8,128)}', space=vmem, size = 0x2000, scoped, tag = 'scratch operand']
  %s0 = inlined_call_operand.vmem [shape: f32[32,32], index: 0, kind: input, shape index: {}]
  %s1 = inlined_call_operand.hbm [shape: f32[4,1,8], index: 1, kind: input, shape index: {}]
  %s2 = inlined_call_operand.hbm [shape: f32[1,32], index: 2, kind: input, shape index: {}]
  %s3 = inlined_call_operand.hbm [shape: f32[1,32], index: 3, kind: input, shape index: {}]
  %s4 = inlined_call_operand.vmem [shape: bf16[2,32,96], index: 4, kind: input, shape index: {}]
  %s5 = inlined_call_operand.vmem [shape: f32[2,1,96], index: 5, kind: input, shape index: {}]
  %s6 = inlined_call_operand.vmem [shape: bf16[2,32,32], index: 6, kind: input, shape index: {}]
  %s7 = inlined_call_operand.vmem [shape: f32[2,1,32], index: 7, kind: input, shape index: {}]
  %s8 = inlined_call_operand.vmem [shape: f32[2,1,32], index: 8, kind: input, shape index: {}]
  %s9 = inlined_call_operand.vmem [shape: f32[2,1,32], index: 9, kind: input, shape index: {}]
  %s10 = inlined_call_operand.hbm [shape: bf16[2,32,64], index: 10, kind: input, shape index: {}]
  %s11 = inlined_call_operand.vmem [shape: f32[2,1,64], index: 11, kind: input, shape index: {}]
  %s12 = inlined_call_operand.vmem [shape: bf16[2,64,32], index: 12, kind: input, shape index: {}]
  %s13 = inlined_call_operand.vmem [shape: f32[2,1,32], index: 13, kind: input, shape index: {}]
  %s14 = inlined_call_operand.vmem [shape: f32[2,1,32], index: 14, kind: input, shape index: {}]
  %s15 = inlined_call_operand.vmem [shape: f32[2,1,32], index: 15, kind: input, shape index: {}]
  %s16 = inlined_call_operand.hbm [shape: f32[4,1,32], index: 16, kind: output, shape index: {}]
  %s17 = sld [smem:[#allocation0]]
  $region121: #{tpu_custom_call.1} parent=0
    _
  %s19 = ssub.s32 1, %s17
  %s20 = scalar_select 0, %s19, %s17
  $region1: #{tpu_custom_call.1} parent=0
    #allocation3 [shape = 'u8[2048]{0}', space=vmem, size = 0x800, scoped, tag = 'input window, operand 1']
    #allocation4 [shape = 's32[2]{0}', space=sflag, size = 0x8, scoped, tag = 'scoped memory for tpu_custom_call.1']
    #allocation5 [shape = 's32[2]{0}', space=sflag, size = 0x8, scoped, tag = 'scoped memory for tpu_custom_call.1']
    #allocation6 [shape = 'u8[512]{0}', space=vmem, size = 0x400, scoped, tag = 'input window, operand 2, single buffered']
    #allocation7 [shape = 's32[1]{0}', space=sflag, size = 0x4, scoped, tag = 'scoped memory for tpu_custom_call.1']
    #allocation8 [shape = 'u8[512]{0}', space=vmem, size = 0x400, scoped, tag = 'input window, operand 3, single buffered']
    #allocation9 [shape = 'u8[16384]{0}', space=vmem, size = 0x4000, scoped, tag = 'input window, operand 10']
    #allocation10 [shape = 's32[2]{0}', space=sflag, size = 0x8, scoped, tag = 'scoped memory for tpu_custom_call.1']
    #allocation11 [shape = 'u8[2048]{0}', space=vmem, size = 0x800, scoped, tag = 'output window, operand 0']
    %21 = vsyncpa [#allocation4], 0
    %s22 = scalar_lea.sflag [#allocation4], 1
    %23 = vsyncpa %s22, 0
    %24 = vsyncpa [#allocation7], 0
    %25 = vsyncpa [#allocation10], 0
    %s26 = scalar_lea.sflag [#allocation10], 1
    %27 = vsyncpa %s26, 0
    %28 = vsyncpa [#allocation5], 0
    %s29 = scalar_lea.sflag [#allocation5], 1
    %30 = vsyncpa %s29, 0
    loop: start=0, step=1, limit=6
    $region2: #{tpu_custom_call.1} parent=1 // loop_pre_header
      _
    $region3: #{tpu_custom_call.1} parent=1 // loop_header
      %s32 = sphi 0, %s36
      %p33 = scmp.ge.s32.totalorder %s32, 6
      %s39 = sphi 0, %s51
      %s40 = sphi 0, %s47
      %s41 = sphi 0, %s39
      %s42 = sphi 0, %s40
      %s43 = sphi 0, %s41
      %s44 = sphi 0, %s42
      %s54 = sphi 0, %s56
      %s57 = sphi 0, %s54
      %s58 = sphi 0, %s57
      %s74 = sphi 0, %s58
      %s80 = sphi 0, %s82
      %s83 = sphi 0, %s80
      %s84 = sphi 0, %s83
      %s100 = sphi 0, %s84
      %s104 = sphi 0, %s104
      %s106 = sphi 0, %s104
      %s107 = sphi 0, %s106
      %s121 = sphi 0, %s107
      %s125 = sphi 0, %s125
      %s127 = sphi 0, %s125
      %s128 = sphi 0, %s127
      %s142 = sphi 0, %s128
      %s148 = sphi 0, %s150
      %s151 = sphi 0, %s148
      %s152 = sphi 0, %s151
      %s168 = sphi 0, %s152
      %s174 = sphi 0, %s176
      %s177 = sphi 0, %s174
      %s178 = sphi 0, %s177
      %s194 = sphi 0, %s178
      %s200 = sphi 0, %s202
      %s203 = sphi 0, %s200
      %s204 = sphi 0, %s203
      %s220 = sphi 0, %s204
      %s226 = sphi 0, %s228
      %s229 = sphi 0, %s226
      %s230 = sphi 0, %s229
      %s246 = sphi 0, %s230
      %s252 = sphi 0, %s254
      %s255 = sphi 0, %s252
      %s256 = sphi 0, %s255
      %s272 = sphi 0, %s256
      %s278 = sphi 0, %s280
      %s281 = sphi 0, %s278
      %s282 = sphi 0, %s281
      %s298 = sphi 0, %s282
      %s304 = sphi 0, %s306
      %s307 = sphi 0, %s304
      %s308 = sphi 0, %s307
      %s324 = sphi 0, %s308
      %s330 = sphi 0, %s332
      %s333 = sphi 0, %s330
      %s334 = sphi 0, %s333
      %s350 = sphi 0, %s334
      %s356 = sphi 0, %s358
      %s359 = sphi 0, %s356
      %s360 = sphi 0, %s359
      %s376 = sphi 0, %s360
      %s382 = sphi 0, %s384
      %s385 = sphi 0, %s382
      %s386 = sphi 0, %s385
      %s402 = sphi 0, %s386
      %s408 = sphi 0, %s410
      %s411 = sphi 0, %s408
      %s412 = sphi 0, %s411
      %s428 = sphi 0, %s412
      %s434 = sphi 0, %s436
      %s437 = sphi 0, %s434
      %s438 = sphi 0, %s437
      %s454 = sphi 0, %s438
      %s460 = sphi 0, %s462
      %s463 = sphi 0, %s460
      %s464 = sphi 0, %s463
      %s480 = sphi 0, %s464
    $region4: #{tpu_custom_call.1} parent=1 // loop_header_branch
      %35 = sbr.rel (%p33) target = $region8
    $region5: #{tpu_custom_call.1} parent=1 // loop_body
      %s37 = ssub.s32 %s32, 1
      %s38 = ssub.s32 %s32, 2
      %s45 = sadd.s32 1, %s40
      %p46 = scmp.ge.s32.totalorder %s45, 2
      %s47 = scalar_select %p46, 0, %s45
      %s48 = sadd.s32 1, %s39
      %s49 = scalar_select %p46, %s48, %s39
      %p50 = scmp.ge.s32.totalorder %s49, 2
      %s51 = scalar_select %p50, 0, %s49
      %s52 = ssub.s32 %s39, %s51
      %p53 = scmp.eq.s32.totalorder %s52, 0
      %s55 = sadd.s32 %s54, 1
      %s56 = scalar_select %p53, %s54, %s55
      %p59 = pneg %p53
      %p60 = scmp.eq.s32.totalorder %s32, 3
      %p61 = por %p59, %p60
      %p62 = scmp.ne.s32.totalorder %s54, %s57
      %p63 = scmp.eq.s32.totalorder %s32, 0
      %p64 = por %p62, %p63
      %p65 = scmp.ne.s32.totalorder %s54, %s57
      %p66 = scmp.eq.s32.totalorder %s37, 3
      %p67 = por %p65, %p66
      %p68 = scmp.ne.s32.totalorder %s57, %s58
      %p69 = scmp.eq.s32.totalorder %s37, 0
      %p70 = por %p68, %p69
      %p71 = scmp.ne.s32.totalorder %s57, %s58
      %p72 = scmp.eq.s32.totalorder %s38, 3
      %p73 = por %p71, %p72
      %p75 = scmp.ne.s32.totalorder %s58, %s74
      %p76 = scmp.eq.s32.totalorder %s38, 0
      %p77 = por %p75, %p76
      %s78 = ssub.s32 %s39, %s51
      %p79 = scmp.eq.s32.totalorder %s78, 0
      %s81 = sadd.s32 %s80, 1
      %s82 = scalar_select %p79, %s80, %s81
      %p85 = pneg %p79
      %p86 = scmp.eq.s32.totalorder %s32, 3
      %p87 = por %p85, %p86
      %p88 = scmp.ne.s32.totalorder %s80, %s83
      %p89 = scmp.eq.s32.totalorder %s32, 0
      %p90 = por %p88, %p89
      %p91 = scmp.ne.s32.totalorder %s80, %s83
      %p92 = scmp.eq.s32.totalorder %s37, 3
      %p93 = por %p91, %p92
      %p94 = scmp.ne.s32.totalorder %s83, %s84
      %p95 = scmp.eq.s32.totalorder %s37, 0
      %p96 = por %p94, %p95
      %p97 = scmp.ne.s32.totalorder %s83, %s84
      %p98 = scmp.eq.s32.totalorder %s38, 3
      %p99 = por %p97, %p98
      %p101 = scmp.ne.s32.totalorder %s84, %s100
      %p102 = scmp.eq.s32.totalorder %s38, 0
      %p103 = por %p101, %p102
      %s105 = sadd.s32 %s104, 1
      %p108 = scmp.eq.s32.totalorder %s32, 3
      %p109 = scmp.ne.s32.totalorder %s104, %s106
      %p110 = scmp.eq.s32.totalorder %s32, 0
      %p111 = por %p109, %p110
      %p112 = scmp.ne.s32.totalorder %s104, %s106
      %p113 = scmp.eq.s32.totalorder %s37, 3
      %p114 = por %p112, %p113
      %p115 = scmp.ne.s32.totalorder %s106, %s107
      %p116 = scmp.eq.s32.totalorder %s37, 0
      %p117 = por %p115, %p116
      %p118 = scmp.ne.s32.totalorder %s106, %s107
      %p119 = scmp.eq.s32.totalorder %s38, 3
      %p120 = por %p118, %p119
      %p122 = scmp.ne.s32.totalorder %s107, %s121
      %p123 = scmp.eq.s32.totalorder %s38, 0
      %p124 = por %p122, %p123
      %s126 = sadd.s32 %s125, 1
      %p129 = scmp.eq.s32.totalorder %s32, 3
      %p130 = scmp.ne.s32.totalorder %s125, %s127
      %p131 = scmp.eq.s32.totalorder %s32, 0
      %p132 = por %p130, %p131
      %p133 = scmp.ne.s32.totalorder %s125, %s127
      %p134 = scmp.eq.s32.totalorder %s37, 3
      %p135 = por %p133, %p134
      %p136 = scmp.ne.s32.totalorder %s127, %s128
      %p137 = scmp.eq.s32.totalorder %s37, 0
      %p138 = por %p136, %p137
      %p139 = scmp.ne.s32.totalorder %s127, %s128
      %p140 = scmp.eq.s32.totalorder %s38, 3
      %p141 = por %p139, %p140
      %p143 = scmp.ne.s32.totalorder %s128, %s142
      %p144 = scmp.eq.s32.totalorder %s38, 0
      %p145 = por %p143, %p144
      %s146 = ssub.s32 %s40, %s47
      %p147 = scmp.eq.s32.totalorder %s146, 0
      %s149 = sadd.s32 %s148, 1
      %s150 = scalar_select %p147, %s148, %s149
      %p153 = pneg %p147
      %p154 = scmp.eq.s32.totalorder %s32, 3
      %p155 = por %p153, %p154
      %p156 = scmp.ne.s32.totalorder %s148, %s151
      %p157 = scmp.eq.s32.totalorder %s32, 0
      %p158 = por %p156, %p157
      %p159 = scmp.ne.s32.totalorder %s148, %s151
      %p160 = scmp.eq.s32.totalorder %s37, 3
      %p161 = por %p159, %p160
      %p162 = scmp.ne.s32.totalorder %s151, %s152
      %p163 = scmp.eq.s32.totalorder %s37, 0
      %p164 = por %p162, %p163
      %p165 = scmp.ne.s32.totalorder %s151, %s152
      %p166 = scmp.eq.s32.totalorder %s38, 3
      %p167 = por %p165, %p166
      %p169 = scmp.ne.s32.totalorder %s152, %s168
      %p170 = scmp.eq.s32.totalorder %s38, 0
      %p171 = por %p169, %p170
      %s172 = ssub.s32 %s40, %s47
      %p173 = scmp.eq.s32.totalorder %s172, 0
      %s175 = sadd.s32 %s174, 1
      %s176 = scalar_select %p173, %s174, %s175
      %p179 = pneg %p173
      %p180 = scmp.eq.s32.totalorder %s32, 3
      %p181 = por %p179, %p180
      %p182 = scmp.ne.s32.totalorder %s174, %s177
      %p183 = scmp.eq.s32.totalorder %s32, 0
      %p184 = por %p182, %p183
      %p185 = scmp.ne.s32.totalorder %s174, %s177
      %p186 = scmp.eq.s32.totalorder %s37, 3
      %p187 = por %p185, %p186
      %p188 = scmp.ne.s32.totalorder %s177, %s178
      %p189 = scmp.eq.s32.totalorder %s37, 0
      %p190 = por %p188, %p189
      %p191 = scmp.ne.s32.totalorder %s177, %s178
      %p192 = scmp.eq.s32.totalorder %s38, 3
      %p193 = por %p191, %p192
      %p195 = scmp.ne.s32.totalorder %s178, %s194
      %p196 = scmp.eq.s32.totalorder %s38, 0
      %p197 = por %p195, %p196
      %s198 = ssub.s32 %s40, %s47
      %p199 = scmp.eq.s32.totalorder %s198, 0
      %s201 = sadd.s32 %s200, 1
      %s202 = scalar_select %p199, %s200, %s201
      %p205 = pneg %p199
      %p206 = scmp.eq.s32.totalorder %s32, 3
      %p207 = por %p205, %p206
      %p208 = scmp.ne.s32.totalorder %s200, %s203
      %p209 = scmp.eq.s32.totalorder %s32, 0
      %p210 = por %p208, %p209
      %p211 = scmp.ne.s32.totalorder %s200, %s203
      %p212 = scmp.eq.s32.totalorder %s37, 3
      %p213 = por %p211, %p212
      %p214 = scmp.ne.s32.totalorder %s203, %s204
      %p215 = scmp.eq.s32.totalorder %s37, 0
      %p216 = por %p214, %p215
      %p217 = scmp.ne.s32.totalorder %s203, %s204
      %p218 = scmp.eq.s32.totalorder %s38, 3
      %p219 = por %p217, %p218
      %p221 = scmp.ne.s32.totalorder %s204, %s220
      %p222 = scmp.eq.s32.totalorder %s38, 0
      %p223 = por %p221, %p222
      %s224 = ssub.s32 %s40, %s47
      %p225 = scmp.eq.s32.totalorder %s224, 0
      %s227 = sadd.s32 %s226, 1
      %s228 = scalar_select %p225, %s226, %s227
      %p231 = pneg %p225
      %p232 = scmp.eq.s32.totalorder %s32, 3
      %p233 = por %p231, %p232
      %p234 = scmp.ne.s32.totalorder %s226, %s229
      %p235 = scmp.eq.s32.totalorder %s32, 0
      %p236 = por %p234, %p235
      %p237 = scmp.ne.s32.totalorder %s226, %s229
      %p238 = scmp.eq.s32.totalorder %s37, 3
      %p239 = por %p237, %p238
      %p240 = scmp.ne.s32.totalorder %s229, %s230
      %p241 = scmp.eq.s32.totalorder %s37, 0
      %p242 = por %p240, %p241
      %p243 = scmp.ne.s32.totalorder %s229, %s230
      %p244 = scmp.eq.s32.totalorder %s38, 3
      %p245 = por %p243, %p244
      %p247 = scmp.ne.s32.totalorder %s230, %s246
      %p248 = scmp.eq.s32.totalorder %s38, 0
      %p249 = por %p247, %p248
      %s250 = ssub.s32 %s40, %s47
      %p251 = scmp.eq.s32.totalorder %s250, 0
      %s253 = sadd.s32 %s252, 1
      %s254 = scalar_select %p251, %s252, %s253
      %p257 = pneg %p251
      %p258 = scmp.eq.s32.totalorder %s32, 3
      %p259 = por %p257, %p258
      %p260 = scmp.ne.s32.totalorder %s252, %s255
      %p261 = scmp.eq.s32.totalorder %s32, 0
      %p262 = por %p260, %p261
      %p263 = scmp.ne.s32.totalorder %s252, %s255
      %p264 = scmp.eq.s32.totalorder %s37, 3
      %p265 = por %p263, %p264
      %p266 = scmp.ne.s32.totalorder %s255, %s256
      %p267 = scmp.eq.s32.totalorder %s37, 0
      %p268 = por %p266, %p267
      %p269 = scmp.ne.s32.totalorder %s255, %s256
      %p270 = scmp.eq.s32.totalorder %s38, 3
      %p271 = por %p269, %p270
      %p273 = scmp.ne.s32.totalorder %s256, %s272
      %p274 = scmp.eq.s32.totalorder %s38, 0
      %p275 = por %p273, %p274
      %s276 = ssub.s32 %s40, %s47
      %p277 = scmp.eq.s32.totalorder %s276, 0
      %s279 = sadd.s32 %s278, 1
      %s280 = scalar_select %p277, %s278, %s279
      %p283 = pneg %p277
      %p284 = scmp.eq.s32.totalorder %s32, 3
      %p285 = por %p283, %p284
      %p286 = scmp.ne.s32.totalorder %s278, %s281
      %p287 = scmp.eq.s32.totalorder %s32, 0
      %p288 = por %p286, %p287
      %p289 = scmp.ne.s32.totalorder %s278, %s281
      %p290 = scmp.eq.s32.totalorder %s37, 3
      %p291 = por %p289, %p290
      %p292 = scmp.ne.s32.totalorder %s281, %s282
      %p293 = scmp.eq.s32.totalorder %s37, 0
      %p294 = por %p292, %p293
      %p295 = scmp.ne.s32.totalorder %s281, %s282
      %p296 = scmp.eq.s32.totalorder %s38, 3
      %p297 = por %p295, %p296
      %p299 = scmp.ne.s32.totalorder %s282, %s298
      %p300 = scmp.eq.s32.totalorder %s38, 0
      %p301 = por %p299, %p300
      %s302 = ssub.s32 %s40, %s47
      %p303 = scmp.eq.s32.totalorder %s302, 0
      %s305 = sadd.s32 %s304, 1
      %s306 = scalar_select %p303, %s304, %s305
      %p309 = pneg %p303
      %p310 = scmp.eq.s32.totalorder %s32, 3
      %p311 = por %p309, %p310
      %p312 = scmp.ne.s32.totalorder %s304, %s307
      %p313 = scmp.eq.s32.totalorder %s32, 0
      %p314 = por %p312, %p313
      %p315 = scmp.ne.s32.totalorder %s304, %s307
      %p316 = scmp.eq.s32.totalorder %s37, 3
      %p317 = por %p315, %p316
      %p318 = scmp.ne.s32.totalorder %s307, %s308
      %p319 = scmp.eq.s32.totalorder %s37, 0
      %p320 = por %p318, %p319
      %p321 = scmp.ne.s32.totalorder %s307, %s308
      %p322 = scmp.eq.s32.totalorder %s38, 3
      %p323 = por %p321, %p322
      %p325 = scmp.ne.s32.totalorder %s308, %s324
      %p326 = scmp.eq.s32.totalorder %s38, 0
      %p327 = por %p325, %p326
      %s328 = ssub.s32 %s40, %s47
      %p329 = scmp.eq.s32.totalorder %s328, 0
      %s331 = sadd.s32 %s330, 1
      %s332 = scalar_select %p329, %s330, %s331
      %p335 = pneg %p329
      %p336 = scmp.eq.s32.totalorder %s32, 3
      %p337 = por %p335, %p336
      %p338 = scmp.ne.s32.totalorder %s330, %s333
      %p339 = scmp.eq.s32.totalorder %s32, 0
      %p340 = por %p338, %p339
      %p341 = scmp.ne.s32.totalorder %s330, %s333
      %p342 = scmp.eq.s32.totalorder %s37, 3
      %p343 = por %p341, %p342
      %p344 = scmp.ne.s32.totalorder %s333, %s334
      %p345 = scmp.eq.s32.totalorder %s37, 0
      %p346 = por %p344, %p345
      %p347 = scmp.ne.s32.totalorder %s333, %s334
      %p348 = scmp.eq.s32.totalorder %s38, 3
      %p349 = por %p347, %p348
      %p351 = scmp.ne.s32.totalorder %s334, %s350
      %p352 = scmp.eq.s32.totalorder %s38, 0
      %p353 = por %p351, %p352
      %s354 = ssub.s32 %s40, %s47
      %p355 = scmp.eq.s32.totalorder %s354, 0
      %s357 = sadd.s32 %s356, 1
      %s358 = scalar_select %p355, %s356, %s357
      %p361 = pneg %p355
      %p362 = scmp.eq.s32.totalorder %s32, 3
      %p363 = por %p361, %p362
      %p364 = scmp.ne.s32.totalorder %s356, %s359
      %p365 = scmp.eq.s32.totalorder %s32, 0
      %p366 = por %p364, %p365
      %p367 = scmp.ne.s32.totalorder %s356, %s359
      %p368 = scmp.eq.s32.totalorder %s37, 3
      %p369 = por %p367, %p368
      %p370 = scmp.ne.s32.totalorder %s359, %s360
      %p371 = scmp.eq.s32.totalorder %s37, 0
      %p372 = por %p370, %p371
      %p373 = scmp.ne.s32.totalorder %s359, %s360
      %p374 = scmp.eq.s32.totalorder %s38, 3
      %p375 = por %p373, %p374
      %p377 = scmp.ne.s32.totalorder %s360, %s376
      %p378 = scmp.eq.s32.totalorder %s38, 0
      %p379 = por %p377, %p378
      %s380 = ssub.s32 %s40, %s47
      %p381 = scmp.eq.s32.totalorder %s380, 0
      %s383 = sadd.s32 %s382, 1
      %s384 = scalar_select %p381, %s382, %s383
      %p387 = pneg %p381
      %p388 = scmp.eq.s32.totalorder %s32, 3
      %p389 = por %p387, %p388
      %p390 = scmp.ne.s32.totalorder %s382, %s385
      %p391 = scmp.eq.s32.totalorder %s32, 0
      %p392 = por %p390, %p391
      %p393 = scmp.ne.s32.totalorder %s382, %s385
      %p394 = scmp.eq.s32.totalorder %s37, 3
      %p395 = por %p393, %p394
      %p396 = scmp.ne.s32.totalorder %s385, %s386
      %p397 = scmp.eq.s32.totalorder %s37, 0
      %p398 = por %p396, %p397
      %p399 = scmp.ne.s32.totalorder %s385, %s386
      %p400 = scmp.eq.s32.totalorder %s38, 3
      %p401 = por %p399, %p400
      %p403 = scmp.ne.s32.totalorder %s386, %s402
      %p404 = scmp.eq.s32.totalorder %s38, 0
      %p405 = por %p403, %p404
      %s406 = ssub.s32 %s40, %s47
      %p407 = scmp.eq.s32.totalorder %s406, 0
      %s409 = sadd.s32 %s408, 1
      %s410 = scalar_select %p407, %s408, %s409
      %p413 = pneg %p407
      %p414 = scmp.eq.s32.totalorder %s32, 3
      %p415 = por %p413, %p414
      %p416 = scmp.ne.s32.totalorder %s408, %s411
      %p417 = scmp.eq.s32.totalorder %s32, 0
      %p418 = por %p416, %p417
      %p419 = scmp.ne.s32.totalorder %s408, %s411
      %p420 = scmp.eq.s32.totalorder %s37, 3
      %p421 = por %p419, %p420
      %p422 = scmp.ne.s32.totalorder %s411, %s412
      %p423 = scmp.eq.s32.totalorder %s37, 0
      %p424 = por %p422, %p423
      %p425 = scmp.ne.s32.totalorder %s411, %s412
      %p426 = scmp.eq.s32.totalorder %s38, 3
      %p427 = por %p425, %p426
      %p429 = scmp.ne.s32.totalorder %s412, %s428
      %p430 = scmp.eq.s32.totalorder %s38, 0
      %p431 = por %p429, %p430
      %s432 = ssub.s32 %s40, %s47
      %p433 = scmp.eq.s32.totalorder %s432, 0
      %s435 = sadd.s32 %s434, 1
      %s436 = scalar_select %p433, %s434, %s435
      %p439 = pneg %p433
      %p440 = scmp.eq.s32.totalorder %s32, 3
      %p441 = por %p439, %p440
      %p442 = scmp.ne.s32.totalorder %s434, %s437
      %p443 = scmp.eq.s32.totalorder %s32, 0
      %p444 = por %p442, %p443
      %p445 = scmp.ne.s32.totalorder %s434, %s437
      %p446 = scmp.eq.s32.totalorder %s37, 3
      %p447 = por %p445, %p446
      %p448 = scmp.ne.s32.totalorder %s437, %s438
      %p449 = scmp.eq.s32.totalorder %s37, 0
      %p450 = por %p448, %p449
      %p451 = scmp.ne.s32.totalorder %s437, %s438
      %p452 = scmp.eq.s32.totalorder %s38, 3
      %p453 = por %p451, %p452
      %p455 = scmp.ne.s32.totalorder %s438, %s454
      %p456 = scmp.eq.s32.totalorder %s38, 0
      %p457 = por %p455, %p456
      %s458 = ssub.s32 %s39, %s51
      %p459 = scmp.eq.s32.totalorder %s458, 0
      %s461 = sadd.s32 %s460, 1
      %s462 = scalar_select %p459, %s460, %s461
      %p465 = pneg %p459
      %p466 = scmp.eq.s32.totalorder %s32, 3
      %p467 = por %p465, %p466
      %p468 = scmp.ne.s32.totalorder %s460, %s463
      %p469 = scmp.eq.s32.totalorder %s32, 0
      %p470 = por %p468, %p469
      %p471 = scmp.ne.s32.totalorder %s460, %s463
      %p472 = scmp.eq.s32.totalorder %s37, 3
      %p473 = por %p471, %p472
      %p474 = scmp.ne.s32.totalorder %s463, %s464
      %p475 = scmp.eq.s32.totalorder %s37, 0
      %p476 = por %p474, %p475
      %p477 = scmp.ne.s32.totalorder %s463, %s464
      %p478 = scmp.eq.s32.totalorder %s38, 3
      %p479 = por %p477, %p478
      %p481 = scmp.ne.s32.totalorder %s464, %s480
      %p482 = scmp.eq.s32.totalorder %s38, 0
      %p483 = por %p481, %p482
      %p484 = scmp.le.s32.totalorder 1, %s32
      %p485 = scmp.lt.s32.totalorder %s32, 5
      %p486 = pnand %p484, %p485
      %p487 = pneg %p486
      // Predicated region
      $region9: #{tpu_custom_call.1} parent=5 // pred_check
        _
      $region10: #{tpu_custom_call.1} parent=5 // pred_check_branch
        %489 = sbr.rel (%p486) target = $region12
      $region11: #{tpu_custom_call.1} parent=5 // pred_region
        %s490 = ssub.s32 %s32, 1
        // Predicated region
        $region13: #{tpu_custom_call.1} parent=11 // pred_check
          %p491 = pneg %p117
        $region14: #{tpu_custom_call.1} parent=11 // pred_check_branch
          %493 = sbr.rel (%p491) target = $region16
        $region15: #{tpu_custom_call.1} parent=11 // pred_region
          %s495 = ssub.s32 16, 16
          %496 = vsyncadd [#allocation7], %s495
          %s498 = sshll.u32 [#allocation6], 4
          %s499 = int_to_ptr.vmem [resolvable:$true] %s498
          %501 = dma.hbm_to_vmem [thread:$0]  %s2, 16, %s499, [#allocation7]
        $region16: #{tpu_custom_call.1} parent=11 // pred_fallthru
          _
        // Predicated region
        $region17: #{tpu_custom_call.1} parent=11 // pred_check
          %p502 = pneg %p138
        $region18: #{tpu_custom_call.1} parent=11 // pred_check_branch
          %504 = sbr.rel (%p502) target = $region20
        $region19: #{tpu_custom_call.1} parent=11 // pred_region
          %s506 = ssub.s32 16, 16
          %507 = vsyncadd [#allocation7], %s506
          %s509 = sshll.u32 [#allocation8], 4
          %s510 = int_to_ptr.vmem [resolvable:$true] %s509
          %512 = dma.hbm_to_vmem [thread:$0]  %s3, 16, %s510, [#allocation7]
        $region20: #{tpu_custom_call.1} parent=11 // pred_fallthru
          _
      $region12: #{tpu_custom_call.1} parent=5 // pred_fallthru
        _
      %p513 = scmp.lt.s32.totalorder %s32, 4
      // Predicated region
      $region21: #{tpu_custom_call.1} parent=5 // pred_check
        %p514 = pneg %p513
      $region22: #{tpu_custom_call.1} parent=5 // pred_check_branch
        %516 = sbr.rel (%p514) target = $region24
      $region23: #{tpu_custom_call.1} parent=5 // pred_region
        // Predicated region
        $region25: #{tpu_custom_call.1} parent=23 // pred_check
          %p517 = pneg %p64
        $region26: #{tpu_custom_call.1} parent=23 // pred_check_branch
          %519 = sbr.rel (%p517) target = $region28
        $region27: #{tpu_custom_call.1} parent=23 // pred_region
          %s520 = smul.u32 2, %s39
          %p521 = scmp.lt.s32.totalorder %s520, 3
          %s522 = scalar_select %p521, %s520, 3
          %s523 = smul.addr %s522, 8
          %s524 = scalar_lea.vmem %s0, %s523
          %s525 = smul.u32 2, %s39
        $region28: #{tpu_custom_call.1} parent=23 // pred_fallthru
          _
        // Predicated region
        $region29: #{tpu_custom_call.1} parent=23 // pred_check
          %p526 = pneg %p90
        $region30: #{tpu_custom_call.1} parent=23 // pred_check_branch
          %528 = sbr.rel (%p526) target = $region32
        $region31: #{tpu_custom_call.1} parent=23 // pred_region
          %s529 = sand.u32 %s80, 1
          %s530 = scalar_lea.sflag [#allocation4], %s529
          %s531 = sand.u32 %s80, 1
          %s532 = smul.addr %s531, 2
          %s533 = scalar_lea.vmem [#allocation3], %s532
          %s534 = smul.u32 2, %s39
          %s536 = ssub.s32 32, 32
          %537 = vsyncadd %s530, %s536
          %s538 = smul.addr %s534, 16
          %s539 = scalar_lea.hbm %s1, %s538
          %s540 = sshll.u32 %s533, 4
          %s541 = int_to_ptr.vmem [resolvable:$true] %s540
          %546 = dma.hbm_to_vmem [thread:$0]  %s539, 32, %s541, %s530, 16, 16, 1
        $region32: #{tpu_custom_call.1} parent=23 // pred_fallthru
          _
        // Predicated region
        $region33: #{tpu_custom_call.1} parent=23 // pred_check
          %p547 = pneg %p158
        $region34: #{tpu_custom_call.1} parent=23 // pred_check_branch
          %549 = sbr.rel (%p547) target = $region36
        $region35: #{tpu_custom_call.1} parent=23 // pred_region
          %p550 = scmp.lt.s32.totalorder %s40, 1
          %s551 = scalar_select %p550, %s40, 1
          %s552 = smul.addr %s551, 4
          %s553 = smul.addr %s552, 4
          %s554 = scalar_lea.vmem %s4, %s553
        $region36: #{tpu_custom_call.1} parent=23 // pred_fallthru
          _
        // Predicated region
        $region37: #{tpu_custom_call.1} parent=23 // pred_check
          %p555 = pneg %p184
        $region38: #{tpu_custom_call.1} parent=23 // pred_check_branch
          %557 = sbr.rel (%p555) target = $region40
        $region39: #{tpu_custom_call.1} parent=23 // pred_region
          %p558 = scmp.lt.s32.totalorder %s40, 1
          %s559 = scalar_select %p558, %s40, 1
          %s560 = scalar_lea.vmem %s5, %s559
        $region40: #{tpu_custom_call.1} parent=23 // pred_fallthru
          _
        // Predicated region
        $region41: #{tpu_custom_call.1} parent=23 // pred_check
          %p561 = pneg %p210
        $region42: #{tpu_custom_call.1} parent=23 // pred_check_branch
          %563 = sbr.rel (%p561) target = $region44
        $region43: #{tpu_custom_call.1} parent=23 // pred_region
          %p564 = scmp.lt.s32.totalorder %s40, 1
          %s565 = scalar_select %p564, %s40, 1
          %s566 = smul.addr %s565, 4
          %s567 = smul.addr %s566, 4
          %s568 = scalar_lea.vmem %s6, %s567
        $region44: #{tpu_custom_call.1} parent=23 // pred_fallthru
          _
        // Predicated region
        $region45: #{tpu_custom_call.1} parent=23 // pred_check
          %p569 = pneg %p236
        $region46: #{tpu_custom_call.1} parent=23 // pred_check_branch
          %571 = sbr.rel (%p569) target = $region48
        $region47: #{tpu_custom_call.1} parent=23 // pred_region
          %p572 = scmp.lt.s32.totalorder %s40, 1
          %s573 = scalar_select %p572, %s40, 1
          %s574 = scalar_lea.vmem %s7, %s573
        $region48: #{tpu_custom_call.1} parent=23 // pred_fallthru
          _
        // Predicated region
        $region49: #{tpu_custom_call.1} parent=23 // pred_check
          %p575 = pneg %p262
        $region50: #{tpu_custom_call.1} parent=23 // pred_check_branch
          %577 = sbr.rel (%p575) target = $region52
        $region51: #{tpu_custom_call.1} parent=23 // pred_region
          %p578 = scmp.lt.s32.totalorder %s40, 1
          %s579 = scalar_select %p578, %s40, 1
          %s580 = scalar_lea.vmem %s8, %s579
        $region52: #{tpu_custom_call.1} parent=23 // pred_fallthru
          _
        // Predicated region
        $region53: #{tpu_custom_call.1} parent=23 // pred_check
          %p581 = pneg %p288
        $region54: #{tpu_custom_call.1} parent=23 // pred_check_branch
          %583 = sbr.rel (%p581) target = $region56
        $region55: #{tpu_custom_call.1} parent=23 // pred_region
          %p584 = scmp.lt.s32.totalorder %s40, 1
          %s585 = scalar_select %p584, %s40, 1
          %s586 = scalar_lea.vmem %s9, %s585
        $region56: #{tpu_custom_call.1} parent=23 // pred_fallthru
          _
        // Predicated region
        $region57: #{tpu_custom_call.1} parent=23 // pred_check
          %p587 = pneg %p314
        $region58: #{tpu_custom_call.1} parent=23 // pred_check_branch
          %589 = sbr.rel (%p587) target = $region60
        $region59: #{tpu_custom_call.1} parent=23 // pred_region
          %s590 = sand.u32 %s304, 1
          %s591 = scalar_lea.sflag [#allocation10], %s590
          %s592 = sand.u32 %s304, 1
          %s593 = smul.addr %s592, 16
          %s594 = scalar_lea.vmem [#allocation9], %s593
          %s596 = ssub.s32 256, 256
          %597 = vsyncadd %s591, %s596
          %s598 = smul.addr %s40, 4
          %s599 = smul.addr %s598, 64
          %s600 = scalar_lea.hbm %s10, %s599
          %s601 = sshll.u32 %s594, 4
          %s602 = int_to_ptr.vmem [resolvable:$true] %s601
          %607 = dma.hbm_to_vmem [thread:$0]  %s600, 256, %s602, %s591, 64, 64, 4
        $region60: #{tpu_custom_call.1} parent=23 // pred_fallthru
          _
        // Predicated region
        $region61: #{tpu_custom_call.1} parent=23 // pred_check
          %p608 = pneg %p340
        $region62: #{tpu_custom_call.1} parent=23 // pred_check_branch
          %610 = sbr.rel (%p608) target = $region64
        $region63: #{tpu_custom_call.1} parent=23 // pred_region
          %p611 = scmp.lt.s32.totalorder %s40, 1
          %s612 = scalar_select %p611, %s40, 1
          %s613 = scalar_lea.vmem %s11, %s612
        $region64: #{tpu_custom_call.1} parent=23 // pred_fallthru
          _
        // Predicated region
        $region65: #{tpu_custom_call.1} parent=23 // pred_check
          %p614 = pneg %p366
        $region66: #{tpu_custom_call.1} parent=23 // pred_check_branch
          %616 = sbr.rel (%p614) target = $region68
        $region67: #{tpu_custom_call.1} parent=23 // pred_region
          %p617 = scmp.lt.s32.totalorder %s40, 1
          %s618 = scalar_select %p617, %s40, 1
          %s619 = smul.addr %s618, 8
          %s620 = smul.addr %s619, 4
          %s621 = scalar_lea.vmem %s12, %s620
        $region68: #{tpu_custom_call.1} parent=23 // pred_fallthru
          _
        // Predicated region
        $region69: #{tpu_custom_call.1} parent=23 // pred_check
          %p622 = pneg %p392
        $region70: #{tpu_custom_call.1} parent=23 // pred_check_branch
          %624 = sbr.rel (%p622) target = $region72
        $region71: #{tpu_custom_call.1} parent=23 // pred_region
          %p625 = scmp.lt.s32.totalorder %s40, 1
          %s626 = scalar_select %p625, %s40, 1
          %s627 = scalar_lea.vmem %s13, %s626
        $region72: #{tpu_custom_call.1} parent=23 // pred_fallthru
          _
        // Predicated region
        $region73: #{tpu_custom_call.1} parent=23 // pred_check
          %p628 = pneg %p418
        $region74: #{tpu_custom_call.1} parent=23 // pred_check_branch
          %630 = sbr.rel (%p628) target = $region76
        $region75: #{tpu_custom_call.1} parent=23 // pred_region
          %p631 = scmp.lt.s32.totalorder %s40, 1
          %s632 = scalar_select %p631, %s40, 1
          %s633 = scalar_lea.vmem %s14, %s632
        $region76: #{tpu_custom_call.1} parent=23 // pred_fallthru
          _
        // Predicated region
        $region77: #{tpu_custom_call.1} parent=23 // pred_check
          %p634 = pneg %p444
        $region78: #{tpu_custom_call.1} parent=23 // pred_check_branch
          %636 = sbr.rel (%p634) target = $region80
        $region79: #{tpu_custom_call.1} parent=23 // pred_region
          %p637 = scmp.lt.s32.totalorder %s40, 1
          %s638 = scalar_select %p637, %s40, 1
          %s639 = scalar_lea.vmem %s15, %s638
        $region80: #{tpu_custom_call.1} parent=23 // pred_fallthru
          _
      $region24: #{tpu_custom_call.1} parent=5 // pred_fallthru
        _
      %p640 = scmp.le.s32.totalorder 1, %s32
      %p641 = scmp.lt.s32.totalorder %s32, 5
      %p642 = pnand %p640, %p641
      %p643 = pneg %p642
      // Predicated region
      $region81: #{tpu_custom_call.1} parent=5 // pred_check
        _
      $region82: #{tpu_custom_call.1} parent=5 // pred_check_branch
        %645 = sbr.rel (%p642) target = $region84
      $region83: #{tpu_custom_call.1} parent=5 // pred_region
        %s646 = ssub.s32 %s32, 1
        %s647 = sand.u32 %s83, 1
        %s648 = scalar_lea.sflag [#allocation4], %s647
        %s649 = sand.u32 %s83, 1
        %s650 = smul.addr %s649, 2
        %s651 = scalar_lea.vmem [#allocation3], %s650
        // Predicated region
        $region85: #{tpu_custom_call.1} parent=83 // pred_check
          %p652 = pneg %p96
        $region86: #{tpu_custom_call.1} parent=83 // pred_check_branch
          %654 = sbr.rel (%p652) target = $region88
        $region87: #{tpu_custom_call.1} parent=83 // pred_region
          %655 = dma.done %s648, 32
        $region88: #{tpu_custom_call.1} parent=83 // pred_fallthru
          _
        // Predicated region
        $region89: #{tpu_custom_call.1} parent=83 // pred_check
          %p656 = pneg %p117
        $region90: #{tpu_custom_call.1} parent=83 // pred_check_branch
          %658 = sbr.rel (%p656) target = $region92
        $region91: #{tpu_custom_call.1} parent=83 // pred_region
          %659 = dma.done [#allocation7], 16
        $region92: #{tpu_custom_call.1} parent=83 // pred_fallthru
          _
        // Predicated region
        $region93: #{tpu_custom_call.1} parent=83 // pred_check
          %p660 = pneg %p138
        $region94: #{tpu_custom_call.1} parent=83 // pred_check_branch
          %662 = sbr.rel (%p660) target = $region96
        $region95: #{tpu_custom_call.1} parent=83 // pred_region
          %663 = dma.done [#allocation7], 16
        $region96: #{tpu_custom_call.1} parent=83 // pred_fallthru
          _
        %s664 = sand.u32 %s307, 1
        %s665 = scalar_lea.sflag [#allocation10], %s664
        %s666 = sand.u32 %s307, 1
        %s667 = smul.addr %s666, 16
        %s668 = scalar_lea.vmem [#allocation9], %s667
        // Predicated region
        $region97: #{tpu_custom_call.1} parent=83 // pred_check
          %p669 = pneg %p320
        $region98: #{tpu_custom_call.1} parent=83 // pred_check_branch
          %671 = sbr.rel (%p669) target = $region100
        $region99: #{tpu_custom_call.1} parent=83 // pred_region
          %672 = dma.done %s665, 256
        $region100: #{tpu_custom_call.1} parent=83 // pred_fallthru
          _
        %s673 = smul.u32 2, %s41
        %p674 = scmp.lt.s32.totalorder %s673, 3
        %s675 = scalar_select %p674, %s673, 3
        %s676 = smul.addr %s675, 8
        %s677 = scalar_lea.vmem %s0, %s676
        %p678 = pneg %p70
        %p679 = pneg %p67
        %s680 = sand.u32 %s83, 1
        %s681 = scalar_lea.sflag [#allocation4], %s680
        %s682 = sand.u32 %s83, 1
        %s683 = smul.addr %s682, 2
        %s684 = scalar_lea.vmem [#allocation3], %s683
        %p685 = pneg %p96
        %p686 = pneg %p93
        %p687 = pneg %p117
        %p688 = pneg %p114
        %p689 = pneg %p138
        %p690 = pneg %p135
        %p691 = scmp.lt.s32.totalorder %s42, 1
        %s692 = scalar_select %p691, %s42, 1
        %s693 = smul.addr %s692, 4
        %s694 = smul.addr %s693, 4
        %s695 = scalar_lea.vmem %s4, %s694
        %p696 = pneg %p164
        %p697 = pneg %p161
        %p698 = scmp.lt.s32.totalorder %s42, 1
        %s699 = scalar_select %p698, %s42, 1
        %s700 = scalar_lea.vmem %s5, %s699
        %p701 = pneg %p190
        %p702 = pneg %p187
        %p703 = scmp.lt.s32.totalorder %s42, 1
        %s704 = scalar_select %p703, %s42, 1
        %s705 = smul.addr %s704, 4
        %s706 = smul.addr %s705, 4
        %s707 = scalar_lea.vmem %s6, %s706
        %p708 = pneg %p216
        %p709 = pneg %p213
        %p710 = scmp.lt.s32.totalorder %s42, 1
        %s711 = scalar_select %p710, %s42, 1
        %s712 = scalar_lea.vmem %s7, %s711
        %p713 = pneg %p242
        %p714 = pneg %p239
        %p715 = scmp.lt.s32.totalorder %s42, 1
        %s716 = scalar_select %p715, %s42, 1
        %s717 = scalar_lea.vmem %s8, %s716
        %p718 = pneg %p268
        %p719 = pneg %p265
        %p720 = scmp.lt.s32.totalorder %s42, 1
        %s721 = scalar_select %p720, %s42, 1
        %s722 = scalar_lea.vmem %s9, %s721
        %p723 = pneg %p294
        %p724 = pneg %p291
        %s725 = sand.u32 %s307, 1
        %s726 = scalar_lea.sflag [#allocation10], %s725
        %s727 = sand.u32 %s307, 1
        %s728 = smul.addr %s727, 16
        %s729 = scalar_lea.vmem [#allocation9], %s728
        %p730 = pneg %p320
        %p731 = pneg %p317
        %p732 = scmp.lt.s32.totalorder %s42, 1
        %s733 = scalar_select %p732, %s42, 1
        %s734 = scalar_lea.vmem %s11, %s733
        %p735 = pneg %p346
        %p736 = pneg %p343
        %p737 = scmp.lt.s32.totalorder %s42, 1
        %s738 = scalar_select %p737, %s42, 1
        %s739 = smul.addr %s738, 8
        %s740 = smul.addr %s739, 4
        %s741 = scalar_lea.vmem %s12, %s740
        %p742 = pneg %p372
        %p743 = pneg %p369
        %p744 = scmp.lt.s32.totalorder %s42, 1
        %s745 = scalar_select %p744, %s42, 1
        %s746 = scalar_lea.vmem %s13, %s745
        %p747 = pneg %p398
        %p748 = pneg %p395
        %p749 = scmp.lt.s32.totalorder %s42, 1
        %s750 = scalar_select %p749, %s42, 1
        %s751 = scalar_lea.vmem %s14, %s750
        %p752 = pneg %p424
        %p753 = pneg %p421
        %p754 = scmp.lt.s32.totalorder %s42, 1
        %s755 = scalar_select %p754, %s42, 1
        %s756 = scalar_lea.vmem %s15, %s755
        %p757 = pneg %p450
        %p758 = pneg %p447
        %p759 = pneg %p476
        %p760 = pneg %p473
        %s761 = sand.u32 %s463, 1
        %s762 = scalar_lea.sflag [#allocation5], %s761
        %s763 = sand.u32 %s463, 1
        %s764 = smul.addr %s763, 2
        %s765 = scalar_lea.vmem [#allocation11], %s764
        %s766 = smul.u32 2, %s41
        %p767 = scmp.lt.s32.totalorder %s766, 3
        %s768 = scalar_select %p767, %s766, 3
        %s769 = smul.addr %s768, 8
        %s770 = scalar_lea.vmem %s0, %s769
        %s771 = smul.u32 2, %s41
        %s772 = smul.u32 2, %s41
        %p773 = scmp.lt.s32.totalorder %s42, 1
        %s774 = scalar_select %p773, %s42, 1
        %s775 = smul.addr %s774, 4
        %s776 = smul.addr %s775, 4
        %s777 = scalar_lea.vmem %s4, %s776
        %p778 = scmp.lt.s32.totalorder %s42, 1
        %s779 = scalar_select %p778, %s42, 1
        %s780 = scalar_lea.vmem %s5, %s779
        %p781 = scmp.lt.s32.totalorder %s42, 1
        %s782 = scalar_select %p781, %s42, 1
        %s783 = smul.addr %s782, 4
        %s784 = smul.addr %s783, 4
        %s785 = scalar_lea.vmem %s6, %s784
        %p786 = scmp.lt.s32.totalorder %s42, 1
        %s787 = scalar_select %p786, %s42, 1
        %s788 = scalar_lea.vmem %s7, %s787
        %p789 = scmp.lt.s32.totalorder %s42, 1
        %s790 = scalar_select %p789, %s42, 1
        %s791 = scalar_lea.vmem %s8, %s790
        %p792 = scmp.lt.s32.totalorder %s42, 1
        %s793 = scalar_select %p792, %s42, 1
        %s794 = scalar_lea.vmem %s9, %s793
        %p795 = scmp.lt.s32.totalorder %s42, 1
        %s796 = scalar_select %p795, %s42, 1
        %s797 = scalar_lea.vmem %s11, %s796
        %p798 = scmp.lt.s32.totalorder %s42, 1
        %s799 = scalar_select %p798, %s42, 1
        %s800 = smul.addr %s799, 8
        %s801 = smul.addr %s800, 4
        %s802 = scalar_lea.vmem %s12, %s801
        %p803 = scmp.lt.s32.totalorder %s42, 1
        %s804 = scalar_select %p803, %s42, 1
        %s805 = scalar_lea.vmem %s13, %s804
        %p806 = scmp.lt.s32.totalorder %s42, 1
        %s807 = scalar_select %p806, %s42, 1
        %s808 = scalar_lea.vmem %s14, %s807
        %p809 = scmp.lt.s32.totalorder %s42, 1
        %s810 = scalar_select %p809, %s42, 1
        %s811 = scalar_lea.vmem %s15, %s810
        %s812 = smul.u32 2, %s41
        %p814 = scmp.eq.s32.totalorder %s42, 0
        // Predicated region
        $region101: #{tpu_custom_call.1} parent=83 // pred_check
          %p815 = pneg %p814
        $region102: #{tpu_custom_call.1} parent=83 // pred_check_branch
          %817 = sbr.rel (%p815) target = $region104
        $region103: #{tpu_custom_call.1} parent=83 // pred_region
          %v818 = vld [vmem:[%s770] sm:$0xff]
          %v819 = vld [vmem:[%s770 + $0x8] sm:$0xff]
          %v820 = vld [vmem:[#allocation6] sm:$0x1]
          %v821 = vld [vmem:[#allocation8] sm:$0x1]
          %vm822 = vcmask 261120
          %v823 = vsel %vm822, %v818, 0.0
          %824 = vadd.xlane.f32.xlu0 %v823
          %v825 = vpop.xlane.xlu0 %824
          %v826 = vsel %vm822, %v819, 0.0
          %827 = vadd.xlane.f32.xlu0 %v826
          %v828 = vpop.xlane.xlu0 %827
          %v829 = vrcp.pop 32.0
          %v830 = vmul.f32 %v825, %v829
          %v831 = vmul.f32 %v828, %v829
          %v832 = vsub.f32 %v818, %v830
          %v833 = vsub.f32 %v819, %v831
          %v834 = vmul.f32 %v832, %v832
          %v835 = vmul.f32 %v833, %v833
          %v836 = vsel %vm822, %v834, 0.0
          %837 = vadd.xlane.f32.xlu0 %v836
          %v838 = vpop.xlane.xlu0 %837
          %v839 = vsel %vm822, %v835, 0.0
          %840 = vadd.xlane.f32.xlu0 %v839
          %v841 = vpop.xlane.xlu0 %840
          %v842 = vmul.f32 %v838, %v829
          %v843 = vmul.f32 %v841, %v829
          %v844 = vadd.f32 %v842, 1e-05
          %v845 = vadd.f32 %v843, 1e-05
          %v846 = vrsqrt.pop %v844
          %v847 = vrsqrt.pop %v845
          %v848 = vmul.f32 %v832, %v846
          %v849 = vmul.f32 %v833, %v847
          %v851 = vlaneseq
          %v852 = vshrl.u32 %v851, 7
          %v853 = vsub.s32 0, %v852
          %v854 = vrot.slane %v820, %v853
          %v856 = vmul.f32 %v848, %v854
          %v857 = vmul.f32 %v849, %v854
          %v859 = vlaneseq
          %v860 = vshrl.u32 %v859, 7
          %v861 = vsub.s32 0, %v860
          %v862 = vrot.slane %v821, %v861
          %v864 = vadd.f32 %v856, %v862
          %v865 = vadd.f32 %v857, %v862
          %866 = vst.msk [vmem:[#allocation2] sm:$0xff] %vm822, %v864
          %867 = vst.msk [vmem:[#allocation2 + $0x8] sm:$0xff] %vm822, %v865
        $region104: #{tpu_custom_call.1} parent=83 // pred_fallthru
          _
        %v868 = vld [vmem:[#allocation2] sm:$0xff]
        %v869 = vld [vmem:[#allocation2 + $0x8] sm:$0xff]
        %v870 = vpack.c.bf16 %v869, %v868
        %v871 = vld [vmem:[%s777] sm:$0xf]
        %v872 = vld [vmem:[%s777 + $0x4] sm:$0xf]
        %v873 = vld [vmem:[%s777 + $0x8] sm:$0xf]
        %v874 = vld [vmem:[%s777 + $0xc] sm:$0xf]
        %v875 = vld [vmem:[%s780] sm:$0x1]
        %v877 = vlaneseq
        %v878 = vshrl.u32 %v877, 7
        %v879 = vsub.s32 0, %v878
        %v880 = vrot.slane %v875, %v879
        %v886 = vunpack.c.l.b16 %v871
        %v887 = vunpack.c.l.b16 %v872
        %v888 = vunpack.c.l.b16 %v873
        %v889 = vunpack.c.l.b16 %v874
        %v890 = vpack.c.b16 %v887, %v886
        %v891 = vpack.c.b16 %v889, %v888
        %vm894 = vcmask 261120
        %v896 = vsel %vm894, %v870, 0
        %898 = vmatprep.subr.bf16.mxu0 0
        %899 = vmatpush1.bf16.msra.mxu0 0
        %900 = vmatprep.subr.bf16.mxu0 0
        %901 = vmatpush1.bf16.msra.mxu0 0
        %902 = vmatprep.subr.bf16.mxu0 0
        %903 = vmatpush1.bf16.msra.mxu0 0
        %904 = vmatprep.subr.bf16.mxu0 0
        %905 = vmatpush1.bf16.msra.mxu0 0
        %906 = vmatprep.subr.bf16.mxu0 0
        %907 = vmatpush1.bf16.msra.mxu0 0
        %908 = vmatprep.subr.bf16.mxu0 0
        %909 = vmatpush1.bf16.msra.mxu0 0
        %910 = vmatprep.subr.bf16.mxu0 0
        %911 = vmatpush1.bf16.msra.mxu0 %v891
        %912 = vmatprep.subr.bf16.mxu0 0
        %913 = vmatpush1.bf16.msra.mxu0 %v890
        %914 = vmatprep.subr.bf16.mxu0 0
        %915 = vmatpush2.bf16.msra.mxu0 0
        %916 = vmatprep.subr.bf16.mxu0 0
        %917 = vmatpush2.bf16.msra.mxu0 0
        %918 = vmatprep.subr.bf16.mxu0 0
        %919 = vmatpush2.bf16.msra.mxu0 0
        %920 = vmatprep.subr.bf16.mxu0 0
        %921 = vmatpush2.bf16.msra.mxu0 0
        %922 = vmatprep.subr.bf16.mxu0 0
        %923 = vmatpush2.bf16.msra.mxu0 0
        %924 = vmatprep.subr.bf16.mxu0 0
        %925 = vmatpush2.bf16.msra.mxu0 0
        %926 = vmatprep.subr.bf16.mxu0 0
        %927 = vmatpush2.bf16.msra.mxu0 0
        %928 = vmatprep.subr.bf16.mxu0 0
        %929 = vmatpush2.bf16.msra.mxu0 0
        %930 = vmatprep.mubr.bf16.mxu0 0
        %931 = vmatmul.mubr.bf16.gmra.mxu0 %v896
        %v932 = vpop.f32.mrf.mxu0
        %v933 = vadd.f32 %v880, %v932
        %v934 = vpop.f32.mrf.mxu0
        %v935 = vpop.f32.mrf.mxu0
        %v936 = vadd.f32 %v880, %v935
        %v937 = vpop.f32.mrf.mxu0
        %938 = vdwg.mxu0
        %v939 = vld [vmem:[%s651] sm:$0x1]
        %v940 = vld [vmem:[%s651 + $0x1] sm:$0x1]
        %v941 = vld [vmem:[%s788] sm:$0x1]
        %v942 = vpack.c.bf16 %v933, %v933
        %v943 = vpack.c.bf16 %v936, %v936
        %v946 = vlaneseq
        %v947 = vshrl.u32 %v946, 7
        %v948 = vsub.s32 0, %v947
        %v949 = vrot.slane %v939, %v948
        %v950 = vlaneseq
        %v951 = vshrl.u32 %v950, 7
        %v952 = vsub.s32 0, %v951
        %v953 = vrot.slane %v940, %v952
        %957 = vrot.lane.b32.xlu0 %v942, 96
        %v958 = vpop.permute.xlu0 %957
        %vm959 = vcmask 64512
        %v961 = vsel %vm959, %v942, 0
        %v964 = vsel %vm959, %v958, 0
        %966 = vmatprep.subr.bf16.mxu0 0
        %967 = vmatpush1.bf16.xpose.msra.mxu0 0
        %968 = vmatprep.subr.bf16.mxu0 0
        %969 = vmatpush1.bf16.xpose.msra.mxu0 0
        %970 = vmatprep.subr.bf16.mxu0 0
        %971 = vmatpush1.bf16.xpose.msra.mxu0 0
        %972 = vmatprep.subr.bf16.mxu0 0
        %973 = vmatpush1.bf16.xpose.msra.mxu0 0
        %974 = vmatprep.subr.bf16.mxu0 0
        %975 = vmatpush1.bf16.xpose.msra.mxu0 0
        %976 = vmatprep.subr.bf16.mxu0 0
        %977 = vmatpush1.bf16.xpose.msra.mxu0 0
        %978 = vmatprep.subr.bf16.mxu0 0
        %979 = vmatpush1.bf16.xpose.msra.mxu0 0
        %980 = vmatprep.subr.bf16.mxu0 0
        %981 = vmatpush1.bf16.xpose.msra.mxu0 %v964
        %982 = vmatprep.subr.bf16.mxu0 0
        %983 = vmatpush2.bf16.xpose.msra.mxu0 0
        %984 = vmatprep.subr.bf16.mxu0 0
        %985 = vmatpush2.bf16.xpose.msra.mxu0 0
        %986 = vmatprep.subr.bf16.mxu0 0
        %987 = vmatpush2.bf16.xpose.msra.mxu0 0
        %988 = vmatprep.subr.bf16.mxu0 0
        %989 = vmatpush2.bf16.xpose.msra.mxu0 0
        %990 = vmatprep.subr.bf16.mxu0 0
        %991 = vmatpush2.bf16.xpose.msra.mxu0 0
        %992 = vmatprep.subr.bf16.mxu0 0
        %993 = vmatpush2.bf16.xpose.msra.mxu0 0
        %994 = vmatprep.subr.bf16.mxu0 0
        %995 = vmatpush2.bf16.xpose.msra.mxu0 0
        %996 = vmatprep.subr.bf16.mxu0 0
        %997 = vmatpush2.bf16.xpose.msra.mxu0 0
        %998 = vmatprep.mubr.bf16.mxu0 0
        %999 = vmatmul.mubr.bf16.gmra.mxu0 %v961
        %v1000 = vpop.f32.mrf.mxu0
        %v1001 = vadd.f32 %v949, %v1000
        %v1002 = vpop.f32.mrf.mxu0
        %v1003 = vpop.f32.mrf.mxu0
        %v1004 = vpop.f32.mrf.mxu0
        %1005 = vdwg.mxu0
        %1007 = vrot.lane.b32.xlu0 %v943, 96
        %v1008 = vpop.permute.xlu0 %1007
        %v1010 = vsel %vm959, %v943, 0
        %v1013 = vsel %vm959, %v1008, 0
        %1015 = vmatprep.subr.bf16.mxu0 0
        %1016 = vmatpush1.bf16.xpose.msra.mxu0 0
        %1017 = vmatprep.subr.bf16.mxu0 0
        %1018 = vmatpush1.bf16.xpose.msra.mxu0 0
        %1019 = vmatprep.subr.bf16.mxu0 0
        %1020 = vmatpush1.bf16.xpose.msra.mxu0 0
        %1021 = vmatprep.subr.bf16.mxu0 0
        %1022 = vmatpush1.bf16.xpose.msra.mxu0 0
        %1023 = vmatprep.subr.bf16.mxu0 0
        %1024 = vmatpush1.bf16.xpose.msra.mxu0 0
        %1025 = vmatprep.subr.bf16.mxu0 0
        %1026 = vmatpush1.bf16.xpose.msra.mxu0 0
        %1027 = vmatprep.subr.bf16.mxu0 0
        %1028 = vmatpush1.bf16.xpose.msra.mxu0 0
        %1029 = vmatprep.subr.bf16.mxu0 0
        %1030 = vmatpush1.bf16.xpose.msra.mxu0 %v1013
        %1031 = vmatprep.subr.bf16.mxu0 0
        %1032 = vmatpush2.bf16.xpose.msra.mxu0 0
        %1033 = vmatprep.subr.bf16.mxu0 0
        %1034 = vmatpush2.bf16.xpose.msra.mxu0 0
        %1035 = vmatprep.subr.bf16.mxu0 0
        %1036 = vmatpush2.bf16.xpose.msra.mxu0 0
        %1037 = vmatprep.subr.bf16.mxu0 0
        %1038 = vmatpush2.bf16.xpose.msra.mxu0 0
        %1039 = vmatprep.subr.bf16.mxu0 0
        %1040 = vmatpush2.bf16.xpose.msra.mxu0 0
        %1041 = vmatprep.subr.bf16.mxu0 0
        %1042 = vmatpush2.bf16.xpose.msra.mxu0 0
        %1043 = vmatprep.subr.bf16.mxu0 0
        %1044 = vmatpush2.bf16.xpose.msra.mxu0 0
        %1045 = vmatprep.subr.bf16.mxu0 0
        %1046 = vmatpush2.bf16.xpose.msra.mxu0 0
        %1047 = vmatprep.mubr.bf16.mxu0 0
        %1048 = vmatmul.mubr.bf16.gmra.mxu0 %v1010
        %v1049 = vpop.f32.mrf.mxu0
        %v1050 = vadd.f32 %v953, %v1049
        %v1051 = vpop.f32.mrf.mxu0
        %v1052 = vpop.f32.mrf.mxu0
        %v1053 = vpop.f32.mrf.mxu0
        %1054 = vdwg.mxu0
        %v1055 = vsel %vm959, %v1001, -inf
        %1056 = vmax.xlane.f32.xlu0 %v1055
        %v1057 = vpop.xlane.xlu0 %1056
        %v1058 = vsel %vm959, %v1050, -inf
        %1059 = vmax.xlane.f32.xlu0 %v1058
        %v1060 = vpop.xlane.xlu0 %1059
        %v1061 = vsub.f32 %v1001, %v1057
        %v1062 = vsub.f32 %v1050, %v1060
        %v1063 = vmul.f32 %v1061, 1.442695
        %v1064 = vpow.pop %v1063
        %v1065 = vmul.f32 %v1062, 1.442695
        %v1066 = vpow.pop %v1065
        %v1067 = vsel %vm959, %v1064, 0.0
        %1068 = vadd.xlane.f32.xlu0 %v1067
        %v1069 = vpop.xlane.xlu0 %1068
        %v1070 = vsel %vm959, %v1066, 0.0
        %1071 = vadd.xlane.f32.xlu0 %v1070
        %v1072 = vpop.xlane.xlu0 %1071
        %v1073 = vrcp.pop %v1069
        %v1074 = vrcp.pop %v1072
        %v1075 = vmul.f32 %v1064, %v1073
        %v1076 = vmul.f32 %v1066, %v1074
        %v1077 = vpack.c.bf16 %v1075, %v1075
        %v1078 = vpack.c.bf16 %v1076, %v1076
        %1079 = vrot.lane.b32.xlu0 %v942, 64
        %v1080 = vpop.permute.xlu0 %1079
        %v1082 = vsel %vm959, %v1077, 0
        %vm1084 = vcmask 1043456
        %v1086 = vsel %vm1084, %v1080, 0
        %1088 = vmatprep.subr.bf16.mxu0 0
        %1089 = vmatpush1.bf16.msra.mxu0 0
        %1090 = vmatprep.subr.bf16.mxu0 0
        %1091 = vmatpush1.bf16.msra.mxu0 0
        %1092 = vmatprep.subr.bf16.mxu0 0
        %1093 = vmatpush1.bf16.msra.mxu0 0
        %1094 = vmatprep.subr.bf16.mxu0 0
        %1095 = vmatpush1.bf16.msra.mxu0 0
        %1096 = vmatprep.subr.bf16.mxu0 0
        %1097 = vmatpush1.bf16.msra.mxu0 0
        %1098 = vmatprep.subr.bf16.mxu0 0
        %1099 = vmatpush1.bf16.msra.mxu0 0
        %1100 = vmatprep.subr.bf16.mxu0 0
        %1101 = vmatpush1.bf16.msra.mxu0 0
        %1102 = vmatprep.subr.bf16.mxu0 0
        %1103 = vmatpush1.bf16.msra.mxu0 %v1086
        %1104 = vmatprep.subr.bf16.mxu0 0
        %1105 = vmatpush2.bf16.msra.mxu0 0
        %1106 = vmatprep.subr.bf16.mxu0 0
        %1107 = vmatpush2.bf16.msra.mxu0 0
        %1108 = vmatprep.subr.bf16.mxu0 0
        %1109 = vmatpush2.bf16.msra.mxu0 0
        %1110 = vmatprep.subr.bf16.mxu0 0
        %1111 = vmatpush2.bf16.msra.mxu0 0
        %1112 = vmatprep.subr.bf16.mxu0 0
        %1113 = vmatpush2.bf16.msra.mxu0 0
        %1114 = vmatprep.subr.bf16.mxu0 0
        %1115 = vmatpush2.bf16.msra.mxu0 0
        %1116 = vmatprep.subr.bf16.mxu0 0
        %1117 = vmatpush2.bf16.msra.mxu0 0
        %1118 = vmatprep.subr.bf16.mxu0 0
        %1119 = vmatpush2.bf16.msra.mxu0 0
        %1120 = vmatprep.mubr.bf16.mxu0 0
        %1121 = vmatmul.mubr.bf16.gmra.mxu0 %v1082
        %v1122 = vpop.f32.mrf.mxu0
        %v1123 = vadd.f32 0.0, %v1122
        %v1124 = vpop.f32.mrf.mxu0
        %v1125 = vpop.f32.mrf.mxu0
        %v1126 = vpop.f32.mrf.mxu0
        %1127 = vdwg.mxu0
        %1128 = vrot.lane.b32.xlu0 %v943, 64
        %v1129 = vpop.permute.xlu0 %1128
        %v1131 = vsel %vm959, %v1078, 0
        %v1134 = vsel %vm1084, %v1129, 0
        %1136 = vmatprep.subr.bf16.mxu0 0
        %1137 = vmatpush1.bf16.msra.mxu0 0
        %1138 = vmatprep.subr.bf16.mxu0 0
        %1139 = vmatpush1.bf16.msra.mxu0 0
        %1140 = vmatprep.subr.bf16.mxu0 0
        %1141 = vmatpush1.bf16.msra.mxu0 0
        %1142 = vmatprep.subr.bf16.mxu0 0
        %1143 = vmatpush1.bf16.msra.mxu0 0
        %1144 = vmatprep.subr.bf16.mxu0 0
        %1145 = vmatpush1.bf16.msra.mxu0 0
        %1146 = vmatprep.subr.bf16.mxu0 0
        %1147 = vmatpush1.bf16.msra.mxu0 0
        %1148 = vmatprep.subr.bf16.mxu0 0
        %1149 = vmatpush1.bf16.msra.mxu0 0
        %1150 = vmatprep.subr.bf16.mxu0 0
        %1151 = vmatpush1.bf16.msra.mxu0 %v1134
        %1152 = vmatprep.subr.bf16.mxu0 0
        %1153 = vmatpush2.bf16.msra.mxu0 0
        %1154 = vmatprep.subr.bf16.mxu0 0
        %1155 = vmatpush2.bf16.msra.mxu0 0
        %1156 = vmatprep.subr.bf16.mxu0 0
        %1157 = vmatpush2.bf16.msra.mxu0 0
        %1158 = vmatprep.subr.bf16.mxu0 0
        %1159 = vmatpush2.bf16.msra.mxu0 0
        %1160 = vmatprep.subr.bf16.mxu0 0
        %1161 = vmatpush2.bf16.msra.mxu0 0
        %1162 = vmatprep.subr.bf16.mxu0 0
        %1163 = vmatpush2.bf16.msra.mxu0 0
        %1164 = vmatprep.subr.bf16.mxu0 0
        %1165 = vmatpush2.bf16.msra.mxu0 0
        %1166 = vmatprep.subr.bf16.mxu0 0
        %1167 = vmatpush2.bf16.msra.mxu0 0
        %1168 = vmatprep.mubr.bf16.mxu0 0
        %1169 = vmatmul.mubr.bf16.gmra.mxu0 %v1131
        %v1170 = vpop.f32.mrf.mxu0
        %v1171 = vadd.f32 0.0, %v1170
        %v1172 = vpop.f32.mrf.mxu0
        %v1173 = vpop.f32.mrf.mxu0
        %v1174 = vpop.f32.mrf.mxu0
        %1175 = vdwg.mxu0
        %v1176 = vpack.c.bf16 %v1171, %v1123
        %v1177 = vld [vmem:[%s785] sm:$0xf]
        %v1179 = vsel %vm959, %v1176, 0
        %v1182 = vsel %vm1084, %v1177, 0
        %1184 = vmatprep.subr.bf16.mxu0 0
        %1185 = vmatpush1.bf16.msra.mxu0 0
        %1186 = vmatprep.subr.bf16.mxu0 0
        %1187 = vmatpush1.bf16.msra.mxu0 0
        %1188 = vmatprep.subr.bf16.mxu0 0
        %1189 = vmatpush1.bf16.msra.mxu0 0
        %1190 = vmatprep.subr.bf16.mxu0 0
        %1191 = vmatpush1.bf16.msra.mxu0 0
        %1192 = vmatprep.subr.bf16.mxu0 0
        %1193 = vmatpush1.bf16.msra.mxu0 0
        %1194 = vmatprep.subr.bf16.mxu0 0
        %1195 = vmatpush1.bf16.msra.mxu0 0
        %1196 = vmatprep.subr.bf16.mxu0 0
        %1197 = vmatpush1.bf16.msra.mxu0 0
        %1198 = vmatprep.subr.bf16.mxu0 0
        %1199 = vmatpush1.bf16.msra.mxu0 %v1182
        %1200 = vmatprep.subr.bf16.mxu0 0
        %1201 = vmatpush2.bf16.msra.mxu0 0
        %1202 = vmatprep.subr.bf16.mxu0 0
        %1203 = vmatpush2.bf16.msra.mxu0 0
        %1204 = vmatprep.subr.bf16.mxu0 0
        %1205 = vmatpush2.bf16.msra.mxu0 0
        %1206 = vmatprep.subr.bf16.mxu0 0
        %1207 = vmatpush2.bf16.msra.mxu0 0
        %1208 = vmatprep.subr.bf16.mxu0 0
        %1209 = vmatpush2.bf16.msra.mxu0 0
        %1210 = vmatprep.subr.bf16.mxu0 0
        %1211 = vmatpush2.bf16.msra.mxu0 0
        %1212 = vmatprep.subr.bf16.mxu0 0
        %1213 = vmatpush2.bf16.msra.mxu0 0
        %1214 = vmatprep.subr.bf16.mxu0 0
        %1215 = vmatpush2.bf16.msra.mxu0 0
        %1216 = vmatprep.mubr.bf16.mxu0 0
        %1217 = vmatmul.mubr.bf16.gmra.mxu0 %v1179
        %v1218 = vpop.f32.mrf.mxu0
        %v1219 = vadd.f32 0.0, %v1218
        %v1220 = vpop.f32.mrf.mxu0
        %v1221 = vpop.f32.mrf.mxu0
        %v1222 = vadd.f32 0.0, %v1221
        %v1223 = vpop.f32.mrf.mxu0
        %1224 = vdwg.mxu0
        %v1226 = vlaneseq
        %v1227 = vshrl.u32 %v1226, 7
        %v1228 = vsub.s32 0, %v1227
        %v1229 = vrot.slane %v941, %v1228
        %v1231 = vadd.f32 %v1229, %v1219
        %v1232 = vadd.f32 %v1229, %v1222
        %1233 = vrot.lane.b32.xlu0 %v942, 120
        %v1234 = vpop.permute.xlu0 %1233
        %1235 = vrot.lane.b32.xlu0 %v942, 88
        %v1236 = vpop.permute.xlu0 %1235
        %v1238 = vsel %vm959, %v1234, 0
        %v1241 = vsel %vm959, %v1236, 0
        %1243 = vmatprep.subr.bf16.mxu0 0
        %1244 = vmatpush1.bf16.xpose.msra.mxu0 0
        %1245 = vmatprep.subr.bf16.mxu0 0
        %1246 = vmatpush1.bf16.xpose.msra.mxu0 0
        %1247 = vmatprep.subr.bf16.mxu0 0
        %1248 = vmatpush1.bf16.xpose.msra.mxu0 0
        %1249 = vmatprep.subr.bf16.mxu0 0
        %1250 = vmatpush1.bf16.xpose.msra.mxu0 0
        %1251 = vmatprep.subr.bf16.mxu0 0
        %1252 = vmatpush1.bf16.xpose.msra.mxu0 0
        %1253 = vmatprep.subr.bf16.mxu0 0
        %1254 = vmatpush1.bf16.xpose.msra.mxu0 0
        %1255 = vmatprep.subr.bf16.mxu0 0
        %1256 = vmatpush1.bf16.xpose.msra.mxu0 0
        %1257 = vmatprep.subr.bf16.mxu0 0
        %1258 = vmatpush1.bf16.xpose.msra.mxu0 %v1241
        %1259 = vmatprep.subr.bf16.mxu0 0
        %1260 = vmatpush2.bf16.xpose.msra.mxu0 0
        %1261 = vmatprep.subr.bf16.mxu0 0
        %1262 = vmatpush2.bf16.xpose.msra.mxu0 0
        %1263 = vmatprep.subr.bf16.mxu0 0
        %1264 = vmatpush2.bf16.xpose.msra.mxu0 0
        %1265 = vmatprep.subr.bf16.mxu0 0
        %1266 = vmatpush2.bf16.xpose.msra.mxu0 0
        %1267 = vmatprep.subr.bf16.mxu0 0
        %1268 = vmatpush2.bf16.xpose.msra.mxu0 0
        %1269 = vmatprep.subr.bf16.mxu0 0
        %1270 = vmatpush2.bf16.xpose.msra.mxu0 0
        %1271 = vmatprep.subr.bf16.mxu0 0
        %1272 = vmatpush2.bf16.xpose.msra.mxu0 0
        %1273 = vmatprep.subr.bf16.mxu0 0
        %1274 = vmatpush2.bf16.xpose.msra.mxu0 0
        %1275 = vmatprep.mubr.bf16.mxu0 0
        %1276 = vmatmul.mubr.bf16.gmra.mxu0 %v1238
        %v1277 = vpop.f32.mrf.mxu0
        %v1278 = vadd.f32 %v949, %v1277
        %v1279 = vpop.f32.mrf.mxu0
        %v1280 = vpop.f32.mrf.mxu0
        %v1281 = vpop.f32.mrf.mxu0
        %1282 = vdwg.mxu0
        %1283 = vrot.lane.b32.xlu0 %v943, 120
        %v1284 = vpop.permute.xlu0 %1283
        %1285 = vrot.lane.b32.xlu0 %v943, 88
        %v1286 = vpop.permute.xlu0 %1285
        %v1288 = vsel %vm959, %v1284, 0
        %v1291 = vsel %vm959, %v1286, 0
        %1293 = vmatprep.subr.bf16.mxu0 0
        %1294 = vmatpush1.bf16.xpose.msra.mxu0 0
        %1295 = vmatprep.subr.bf16.mxu0 0
        %1296 = vmatpush1.bf16.xpose.msra.mxu0 0
        %1297 = vmatprep.subr.bf16.mxu0 0
        %1298 = vmatpush1.bf16.xpose.msra.mxu0 0
        %1299 = vmatprep.subr.bf16.mxu0 0
        %1300 = vmatpush1.bf16.xpose.msra.mxu0 0
        %1301 = vmatprep.subr.bf16.mxu0 0
        %1302 = vmatpush1.bf16.xpose.msra.mxu0 0
        %1303 = vmatprep.subr.bf16.mxu0 0
        %1304 = vmatpush1.bf16.xpose.msra.mxu0 0
        %1305 = vmatprep.subr.bf16.mxu0 0
        %1306 = vmatpush1.bf16.xpose.msra.mxu0 0
        %1307 = vmatprep.subr.bf16.mxu0 0
        %1308 = vmatpush1.bf16.xpose.msra.mxu0 %v1291
        %1309 = vmatprep.subr.bf16.mxu0 0
        %1310 = vmatpush2.bf16.xpose.msra.mxu0 0
        %1311 = vmatprep.subr.bf16.mxu0 0
        %1312 = vmatpush2.bf16.xpose.msra.mxu0 0
        %1313 = vmatprep.subr.bf16.mxu0 0
        %1314 = vmatpush2.bf16.xpose.msra.mxu0 0
        %1315 = vmatprep.subr.bf16.mxu0 0
        %1316 = vmatpush2.bf16.xpose.msra.mxu0 0
        %1317 = vmatprep.subr.bf16.mxu0 0
        %1318 = vmatpush2.bf16.xpose.msra.mxu0 0
        %1319 = vmatprep.subr.bf16.mxu0 0
        %1320 = vmatpush2.bf16.xpose.msra.mxu0 0
        %1321 = vmatprep.subr.bf16.mxu0 0
        %1322 = vmatpush2.bf16.xpose.msra.mxu0 0
        %1323 = vmatprep.subr.bf16.mxu0 0
        %1324 = vmatpush2.bf16.xpose.msra.mxu0 0
        %1325 = vmatprep.mubr.bf16.mxu0 0
        %1326 = vmatmul.mubr.bf16.gmra.mxu0 %v1288
        %v1327 = vpop.f32.mrf.mxu0
        %v1328 = vadd.f32 %v953, %v1327
        %v1329 = vpop.f32.mrf.mxu0
        %v1330 = vpop.f32.mrf.mxu0
        %v1331 = vpop.f32.mrf.mxu0
        %1332 = vdwg.mxu0
        %v1333 = vsel %vm959, %v1278, -inf
        %1334 = vmax.xlane.f32.xlu0 %v1333
        %v1335 = vpop.xlane.xlu0 %1334
        %v1336 = vsel %vm959, %v1328, -inf
        %1337 = vmax.xlane.f32.xlu0 %v1336
        %v1338 = vpop.xlane.xlu0 %1337
        %v1339 = vsub.f32 %v1278, %v1335
        %v1340 = vsub.f32 %v1328, %v1338
        %v1341 = vmul.f32 %v1339, 1.442695
        %v1342 = vpow.pop %v1341
        %v1343 = vmul.f32 %v1340, 1.442695
        %v1344 = vpow.pop %v1343
        %v1345 = vsel %vm959, %v1342, 0.0
        %1346 = vadd.xlane.f32.xlu0 %v1345
        %v1347 = vpop.xlane.xlu0 %1346
        %v1348 = vsel %vm959, %v1344, 0.0
        %1349 = vadd.xlane.f32.xlu0 %v1348
        %v1350 = vpop.xlane.xlu0 %1349
        %v1351 = vrcp.pop %v1347
        %v1352 = vrcp.pop %v1350
        %v1353 = vmul.f32 %v1342, %v1351
        %v1354 = vmul.f32 %v1344, %v1352
        %v1355 = vpack.c.bf16 %v1353, %v1353
        %v1356 = vpack.c.bf16 %v1354, %v1354
        %1357 = vrot.lane.b32.xlu0 %v942, 56
        %v1358 = vpop.permute.xlu0 %1357
        %v1360 = vsel %vm959, %v1355, 0
        %v1363 = vsel %vm1084, %v1358, 0
        %1365 = vmatprep.subr.bf16.mxu0 0
        %1366 = vmatpush1.bf16.msra.mxu0 0
        %1367 = vmatprep.subr.bf16.mxu0 0
        %1368 = vmatpush1.bf16.msra.mxu0 0
        %1369 = vmatprep.subr.bf16.mxu0 0
        %1370 = vmatpush1.bf16.msra.mxu0 0
        %1371 = vmatprep.subr.bf16.mxu0 0
        %1372 = vmatpush1.bf16.msra.mxu0 0
        %1373 = vmatprep.subr.bf16.mxu0 0
        %1374 = vmatpush1.bf16.msra.mxu0 0
        %1375 = vmatprep.subr.bf16.mxu0 0
        %1376 = vmatpush1.bf16.msra.mxu0 0
        %1377 = vmatprep.subr.bf16.mxu0 0
        %1378 = vmatpush1.bf16.msra.mxu0 0
        %1379 = vmatprep.subr.bf16.mxu0 0
        %1380 = vmatpush1.bf16.msra.mxu0 %v1363
        %1381 = vmatprep.subr.bf16.mxu0 0
        %1382 = vmatpush2.bf16.msra.mxu0 0
        %1383 = vmatprep.subr.bf16.mxu0 0
        %1384 = vmatpush2.bf16.msra.mxu0 0
        %1385 = vmatprep.subr.bf16.mxu0 0
        %1386 = vmatpush2.bf16.msra.mxu0 0
        %1387 = vmatprep.subr.bf16.mxu0 0
        %1388 = vmatpush2.bf16.msra.mxu0 0
        %1389 = vmatprep.subr.bf16.mxu0 0
        %1390 = vmatpush2.bf16.msra.mxu0 0
        %1391 = vmatprep.subr.bf16.mxu0 0
        %1392 = vmatpush2.bf16.msra.mxu0 0
        %1393 = vmatprep.subr.bf16.mxu0 0
        %1394 = vmatpush2.bf16.msra.mxu0 0
        %1395 = vmatprep.subr.bf16.mxu0 0
        %1396 = vmatpush2.bf16.msra.mxu0 0
        %1397 = vmatprep.mubr.bf16.mxu0 0
        %1398 = vmatmul.mubr.bf16.gmra.mxu0 %v1360
        %v1399 = vpop.f32.mrf.mxu0
        %v1400 = vadd.f32 0.0, %v1399
        %v1401 = vpop.f32.mrf.mxu0
        %v1402 = vpop.f32.mrf.mxu0
        %v1403 = vpop.f32.mrf.mxu0
        %1404 = vdwg.mxu0
        %1405 = vrot.lane.b32.xlu0 %v943, 56
        %v1406 = vpop.permute.xlu0 %1405
        %v1408 = vsel %vm959, %v1356, 0
        %v1411 = vsel %vm1084, %v1406, 0
        %1413 = vmatprep.subr.bf16.mxu0 0
        %1414 = vmatpush1.bf16.msra.mxu0 0
        %1415 = vmatprep.subr.bf16.mxu0 0
        %1416 = vmatpush1.bf16.msra.mxu0 0
        %1417 = vmatprep.subr.bf16.mxu0 0
        %1418 = vmatpush1.bf16.msra.mxu0 0
        %1419 = vmatprep.subr.bf16.mxu0 0
        %1420 = vmatpush1.bf16.msra.mxu0 0
        %1421 = vmatprep.subr.bf16.mxu0 0
        %1422 = vmatpush1.bf16.msra.mxu0 0
        %1423 = vmatprep.subr.bf16.mxu0 0
        %1424 = vmatpush1.bf16.msra.mxu0 0
        %1425 = vmatprep.subr.bf16.mxu0 0
        %1426 = vmatpush1.bf16.msra.mxu0 0
        %1427 = vmatprep.subr.bf16.mxu0 0
        %1428 = vmatpush1.bf16.msra.mxu0 %v1411
        %1429 = vmatprep.subr.bf16.mxu0 0
        %1430 = vmatpush2.bf16.msra.mxu0 0
        %1431 = vmatprep.subr.bf16.mxu0 0
        %1432 = vmatpush2.bf16.msra.mxu0 0
        %1433 = vmatprep.subr.bf16.mxu0 0
        %1434 = vmatpush2.bf16.msra.mxu0 0
        %1435 = vmatprep.subr.bf16.mxu0 0
        %1436 = vmatpush2.bf16.msra.mxu0 0
        %1437 = vmatprep.subr.bf16.mxu0 0
        %1438 = vmatpush2.bf16.msra.mxu0 0
        %1439 = vmatprep.subr.bf16.mxu0 0
        %1440 = vmatpush2.bf16.msra.mxu0 0
        %1441 = vmatprep.subr.bf16.mxu0 0
        %1442 = vmatpush2.bf16.msra.mxu0 0
        %1443 = vmatprep.subr.bf16.mxu0 0
        %1444 = vmatpush2.bf16.msra.mxu0 0
        %1445 = vmatprep.mubr.bf16.mxu0 0
        %1446 = vmatmul.mubr.bf16.gmra.mxu0 %v1408
        %v1447 = vpop.f32.mrf.mxu0
        %v1448 = vadd.f32 0.0, %v1447
        %v1449 = vpop.f32.mrf.mxu0
        %v1450 = vpop.f32.mrf.mxu0
        %v1451 = vpop.f32.mrf.mxu0
        %1452 = vdwg.mxu0
        %v1453 = vpack.c.bf16 %v1448, %v1400
        %v1454 = vld [vmem:[%s785 + $0x4] sm:$0xf]
        %v1456 = vsel %vm959, %v1453, 0
        %v1459 = vsel %vm1084, %v1454, 0
        %1461 = vmatprep.subr.bf16.mxu0 0
        %1462 = vmatpush1.bf16.msra.mxu0 0
        %1463 = vmatprep.subr.bf16.mxu0 0
        %1464 = vmatpush1.bf16.msra.mxu0 0
        %1465 = vmatprep.subr.bf16.mxu0 0
        %1466 = vmatpush1.bf16.msra.mxu0 0
        %1467 = vmatprep.subr.bf16.mxu0 0
        %1468 = vmatpush1.bf16.msra.mxu0 0
        %1469 = vmatprep.subr.bf16.mxu0 0
        %1470 = vmatpush1.bf16.msra.mxu0 0
        %1471 = vmatprep.subr.bf16.mxu0 0
        %1472 = vmatpush1.bf16.msra.mxu0 0
        %1473 = vmatprep.subr.bf16.mxu0 0
        %1474 = vmatpush1.bf16.msra.mxu0 0
        %1475 = vmatprep.subr.bf16.mxu0 0
        %1476 = vmatpush1.bf16.msra.mxu0 %v1459
        %1477 = vmatprep.subr.bf16.mxu0 0
        %1478 = vmatpush2.bf16.msra.mxu0 0
        %1479 = vmatprep.subr.bf16.mxu0 0
        %1480 = vmatpush2.bf16.msra.mxu0 0
        %1481 = vmatprep.subr.bf16.mxu0 0
        %1482 = vmatpush2.bf16.msra.mxu0 0
        %1483 = vmatprep.subr.bf16.mxu0 0
        %1484 = vmatpush2.bf16.msra.mxu0 0
        %1485 = vmatprep.subr.bf16.mxu0 0
        %1486 = vmatpush2.bf16.msra.mxu0 0
        %1487 = vmatprep.subr.bf16.mxu0 0
        %1488 = vmatpush2.bf16.msra.mxu0 0
        %1489 = vmatprep.subr.bf16.mxu0 0
        %1490 = vmatpush2.bf16.msra.mxu0 0
        %1491 = vmatprep.subr.bf16.mxu0 0
        %1492 = vmatpush2.bf16.msra.mxu0 0
        %1493 = vmatprep.mubr.bf16.mxu0 0
        %1494 = vmatmul.mubr.bf16.gmra.mxu0 %v1456
        %v1495 = vpop.f32.mrf.mxu0
        %v1496 = vadd.f32 0.0, %v1495
        %v1497 = vpop.f32.mrf.mxu0
        %v1498 = vpop.f32.mrf.mxu0
        %v1499 = vadd.f32 0.0, %v1498
        %v1500 = vpop.f32.mrf.mxu0
        %1501 = vdwg.mxu0
        %v1502 = vadd.f32 %v1231, %v1496
        %v1503 = vadd.f32 %v1232, %v1499
        %1504 = vrot.lane.b32.xlu0 %v942, 112
        %v1505 = vpop.permute.xlu0 %1504
        %1506 = vrot.lane.b32.xlu0 %v942, 80
        %v1507 = vpop.permute.xlu0 %1506
        %v1509 = vsel %vm959, %v1505, 0
        %v1512 = vsel %vm959, %v1507, 0
        %1514 = vmatprep.subr.bf16.mxu0 0
        %1515 = vmatpush1.bf16.xpose.msra.mxu0 0
        %1516 = vmatprep.subr.bf16.mxu0 0
        %1517 = vmatpush1.bf16.xpose.msra.mxu0 0
        %1518 = vmatprep.subr.bf16.mxu0 0
        %1519 = vmatpush1.bf16.xpose.msra.mxu0 0
        %1520 = vmatprep.subr.bf16.mxu0 0
        %1521 = vmatpush1.bf16.xpose.msra.mxu0 0
        %1522 = vmatprep.subr.bf16.mxu0 0
        %1523 = vmatpush1.bf16.xpose.msra.mxu0 0
        %1524 = vmatprep.subr.bf16.mxu0 0
        %1525 = vmatpush1.bf16.xpose.msra.mxu0 0
        %1526 = vmatprep.subr.bf16.mxu0 0
        %1527 = vmatpush1.bf16.xpose.msra.mxu0 0
        %1528 = vmatprep.subr.bf16.mxu0 0
        %1529 = vmatpush1.bf16.xpose.msra.mxu0 %v1512
        %1530 = vmatprep.subr.bf16.mxu0 0
        %1531 = vmatpush2.bf16.xpose.msra.mxu0 0
        %1532 = vmatprep.subr.bf16.mxu0 0
        %1533 = vmatpush2.bf16.xpose.msra.mxu0 0
        %1534 = vmatprep.subr.bf16.mxu0 0
        %1535 = vmatpush2.bf16.xpose.msra.mxu0 0
        %1536 = vmatprep.subr.bf16.mxu0 0
        %1537 = vmatpush2.bf16.xpose.msra.mxu0 0
        %1538 = vmatprep.subr.bf16.mxu0 0
        %1539 = vmatpush2.bf16.xpose.msra.mxu0 0
        %1540 = vmatprep.subr.bf16.mxu0 0
        %1541 = vmatpush2.bf16.xpose.msra.mxu0 0
        %1542 = vmatprep.subr.bf16.mxu0 0
        %1543 = vmatpush2.bf16.xpose.msra.mxu0 0
        %1544 = vmatprep.subr.bf16.mxu0 0
        %1545 = vmatpush2.bf16.xpose.msra.mxu0 0
        %1546 = vmatprep.mubr.bf16.mxu0 0
        %1547 = vmatmul.mubr.bf16.gmra.mxu0 %v1509
        %v1548 = vpop.f32.mrf.mxu0
        %v1549 = vadd.f32 %v949, %v1548
        %v1550 = vpop.f32.mrf.mxu0
        %v1551 = vpop.f32.mrf.mxu0
        %v1552 = vpop.f32.mrf.mxu0
        %1553 = vdwg.mxu0
        %1554 = vrot.lane.b32.xlu0 %v943, 112
        %v1555 = vpop.permute.xlu0 %1554
        %1556 = vrot.lane.b32.xlu0 %v943, 80
        %v1557 = vpop.permute.xlu0 %1556
        %v1559 = vsel %vm959, %v1555, 0
        %v1562 = vsel %vm959, %v1557, 0
        %1564 = vmatprep.subr.bf16.mxu0 0
        %1565 = vmatpush1.bf16.xpose.msra.mxu0 0
        %1566 = vmatprep.subr.bf16.mxu0 0
        %1567 = vmatpush1.bf16.xpose.msra.mxu0 0
        %1568 = vmatprep.subr.bf16.mxu0 0
        %1569 = vmatpush1.bf16.xpose.msra.mxu0 0
        %1570 = vmatprep.subr.bf16.mxu0 0
        %1571 = vmatpush1.bf16.xpose.msra.mxu0 0
        %1572 = vmatprep.subr.bf16.mxu0 0
        %1573 = vmatpush1.bf16.xpose.msra.mxu0 0
        %1574 = vmatprep.subr.bf16.mxu0 0
        %1575 = vmatpush1.bf16.xpose.msra.mxu0 0
        %1576 = vmatprep.subr.bf16.mxu0 0
        %1577 = vmatpush1.bf16.xpose.msra.mxu0 0
        %1578 = vmatprep.subr.bf16.mxu0 0
        %1579 = vmatpush1.bf16.xpose.msra.mxu0 %v1562
        %1580 = vmatprep.subr.bf16.mxu0 0
        %1581 = vmatpush2.bf16.xpose.msra.mxu0 0
        %1582 = vmatprep.subr.bf16.mxu0 0
        %1583 = vmatpush2.bf16.xpose.msra.mxu0 0
        %1584 = vmatprep.subr.bf16.mxu0 0
        %1585 = vmatpush2.bf16.xpose.msra.mxu0 0
        %1586 = vmatprep.subr.bf16.mxu0 0
        %1587 = vmatpush2.bf16.xpose.msra.mxu0 0
        %1588 = vmatprep.subr.bf16.mxu0 0
        %1589 = vmatpush2.bf16.xpose.msra.mxu0 0
        %1590 = vmatprep.subr.bf16.mxu0 0
        %1591 = vmatpush2.bf16.xpose.msra.mxu0 0
        %1592 = vmatprep.subr.bf16.mxu0 0
        %1593 = vmatpush2.bf16.xpose.msra.mxu0 0
        %1594 = vmatprep.subr.bf16.mxu0 0
        %1595 = vmatpush2.bf16.xpose.msra.mxu0 0
        %1596 = vmatprep.mubr.bf16.mxu0 0
        %1597 = vmatmul.mubr.bf16.gmra.mxu0 %v1559
        %v1598 = vpop.f32.mrf.mxu0
        %v1599 = vadd.f32 %v953, %v1598
        %v1600 = vpop.f32.mrf.mxu0
        %v1601 = vpop.f32.mrf.mxu0
        %v1602 = vpop.f32.mrf.mxu0
        %1603 = vdwg.mxu0
        %v1604 = vsel %vm959, %v1549, -inf
        %1605 = vmax.xlane.f32.xlu0 %v1604
        %v1606 = vpop.xlane.xlu0 %1605
        %v1607 = vsel %vm959, %v1599, -inf
        %1608 = vmax.xlane.f32.xlu0 %v1607
        %v1609 = vpop.xlane.xlu0 %1608
        %v1610 = vsub.f32 %v1549, %v1606
        %v1611 = vsub.f32 %v1599, %v1609
        %v1612 = vmul.f32 %v1610, 1.442695
        %v1613 = vpow.pop %v1612
        %v1614 = vmul.f32 %v1611, 1.442695
        %v1615 = vpow.pop %v1614
        %v1616 = vsel %vm959, %v1613, 0.0
        %1617 = vadd.xlane.f32.xlu0 %v1616
        %v1618 = vpop.xlane.xlu0 %1617
        %v1619 = vsel %vm959, %v1615, 0.0
        %1620 = vadd.xlane.f32.xlu0 %v1619
        %v1621 = vpop.xlane.xlu0 %1620
        %v1622 = vrcp.pop %v1618
        %v1623 = vrcp.pop %v1621
        %v1624 = vmul.f32 %v1613, %v1622
        %v1625 = vmul.f32 %v1615, %v1623
        %v1626 = vpack.c.bf16 %v1624, %v1624
        %v1627 = vpack.c.bf16 %v1625, %v1625
        %1628 = vrot.lane.b32.xlu0 %v942, 48
        %v1629 = vpop.permute.xlu0 %1628
        %v1631 = vsel %vm959, %v1626, 0
        %v1634 = vsel %vm1084, %v1629, 0
        %1636 = vmatprep.subr.bf16.mxu0 0
        %1637 = vmatpush1.bf16.msra.mxu0 0
        %1638 = vmatprep.subr.bf16.mxu0 0
        %1639 = vmatpush1.bf16.msra.mxu0 0
        %1640 = vmatprep.subr.bf16.mxu0 0
        %1641 = vmatpush1.bf16.msra.mxu0 0
        %1642 = vmatprep.subr.bf16.mxu0 0
        %1643 = vmatpush1.bf16.msra.mxu0 0
        %1644 = vmatprep.subr.bf16.mxu0 0
        %1645 = vmatpush1.bf16.msra.mxu0 0
        %1646 = vmatprep.subr.bf16.mxu0 0
        %1647 = vmatpush1.bf16.msra.mxu0 0
        %1648 = vmatprep.subr.bf16.mxu0 0
        %1649 = vmatpush1.bf16.msra.mxu0 0
        %1650 = vmatprep.subr.bf16.mxu0 0
        %1651 = vmatpush1.bf16.msra.mxu0 %v1634
        %1652 = vmatprep.subr.bf16.mxu0 0
        %1653 = vmatpush2.bf16.msra.mxu0 0
        %1654 = vmatprep.subr.bf16.mxu0 0
        %1655 = vmatpush2.bf16.msra.mxu0 0
        %1656 = vmatprep.subr.bf16.mxu0 0
        %1657 = vmatpush2.bf16.msra.mxu0 0
        %1658 = vmatprep.subr.bf16.mxu0 0
        %1659 = vmatpush2.bf16.msra.mxu0 0
        %1660 = vmatprep.subr.bf16.mxu0 0
        %1661 = vmatpush2.bf16.msra.mxu0 0
        %1662 = vmatprep.subr.bf16.mxu0 0
        %1663 = vmatpush2.bf16.msra.mxu0 0
        %1664 = vmatprep.subr.bf16.mxu0 0
        %1665 = vmatpush2.bf16.msra.mxu0 0
        %1666 = vmatprep.subr.bf16.mxu0 0
        %1667 = vmatpush2.bf16.msra.mxu0 0
        %1668 = vmatprep.mubr.bf16.mxu0 0
        %1669 = vmatmul.mubr.bf16.gmra.mxu0 %v1631
        %v1670 = vpop.f32.mrf.mxu0
        %v1671 = vadd.f32 0.0, %v1670
        %v1672 = vpop.f32.mrf.mxu0
        %v1673 = vpop.f32.mrf.mxu0
        %v1674 = vpop.f32.mrf.mxu0
        %1675 = vdwg.mxu0
        %1676 = vrot.lane.b32.xlu0 %v943, 48
        %v1677 = vpop.permute.xlu0 %1676
        %v1679 = vsel %vm959, %v1627, 0
        %v1682 = vsel %vm1084, %v1677, 0
        %1684 = vmatprep.subr.bf16.mxu0 0
        %1685 = vmatpush1.bf16.msra.mxu0 0
        %1686 = vmatprep.subr.bf16.mxu0 0
        %1687 = vmatpush1.bf16.msra.mxu0 0
        %1688 = vmatprep.subr.bf16.mxu0 0
        %1689 = vmatpush1.bf16.msra.mxu0 0
        %1690 = vmatprep.subr.bf16.mxu0 0
        %1691 = vmatpush1.bf16.msra.mxu0 0
        %1692 = vmatprep.subr.bf16.mxu0 0
        %1693 = vmatpush1.bf16.msra.mxu0 0
        %1694 = vmatprep.subr.bf16.mxu0 0
        %1695 = vmatpush1.bf16.msra.mxu0 0
        %1696 = vmatprep.subr.bf16.mxu0 0
        %1697 = vmatpush1.bf16.msra.mxu0 0
        %1698 = vmatprep.subr.bf16.mxu0 0
        %1699 = vmatpush1.bf16.msra.mxu0 %v1682
        %1700 = vmatprep.subr.bf16.mxu0 0
        %1701 = vmatpush2.bf16.msra.mxu0 0
        %1702 = vmatprep.subr.bf16.mxu0 0
        %1703 = vmatpush2.bf16.msra.mxu0 0
        %1704 = vmatprep.subr.bf16.mxu0 0
        %1705 = vmatpush2.bf16.msra.mxu0 0
        %1706 = vmatprep.subr.bf16.mxu0 0
        %1707 = vmatpush2.bf16.msra.mxu0 0
        %1708 = vmatprep.subr.bf16.mxu0 0
        %1709 = vmatpush2.bf16.msra.mxu0 0
        %1710 = vmatprep.subr.bf16.mxu0 0
        %1711 = vmatpush2.bf16.msra.mxu0 0
        %1712 = vmatprep.subr.bf16.mxu0 0
        %1713 = vmatpush2.bf16.msra.mxu0 0
        %1714 = vmatprep.subr.bf16.mxu0 0
        %1715 = vmatpush2.bf16.msra.mxu0 0
        %1716 = vmatprep.mubr.bf16.mxu0 0
        %1717 = vmatmul.mubr.bf16.gmra.mxu0 %v1679
        %v1718 = vpop.f32.mrf.mxu0
        %v1719 = vadd.f32 0.0, %v1718
        %v1720 = vpop.f32.mrf.mxu0
        %v1721 = vpop.f32.mrf.mxu0
        %v1722 = vpop.f32.mrf.mxu0
        %1723 = vdwg.mxu0
        %v1724 = vpack.c.bf16 %v1719, %v1671
        %v1725 = vld [vmem:[%s785 + $0x8] sm:$0xf]
        %v1727 = vsel %vm959, %v1724, 0
        %v1730 = vsel %vm1084, %v1725, 0
        %1732 = vmatprep.subr.bf16.mxu0 0
        %1733 = vmatpush1.bf16.msra.mxu0 0
        %1734 = vmatprep.subr.bf16.mxu0 0
        %1735 = vmatpush1.bf16.msra.mxu0 0
        %1736 = vmatprep.subr.bf16.mxu0 0
        %1737 = vmatpush1.bf16.msra.mxu0 0
        %1738 = vmatprep.subr.bf16.mxu0 0
        %1739 = vmatpush1.bf16.msra.mxu0 0
        %1740 = vmatprep.subr.bf16.mxu0 0
        %1741 = vmatpush1.bf16.msra.mxu0 0
        %1742 = vmatprep.subr.bf16.mxu0 0
        %1743 = vmatpush1.bf16.msra.mxu0 0
        %1744 = vmatprep.subr.bf16.mxu0 0
        %1745 = vmatpush1.bf16.msra.mxu0 0
        %1746 = vmatprep.subr.bf16.mxu0 0
        %1747 = vmatpush1.bf16.msra.mxu0 %v1730
        %1748 = vmatprep.subr.bf16.mxu0 0
        %1749 = vmatpush2.bf16.msra.mxu0 0
        %1750 = vmatprep.subr.bf16.mxu0 0
        %1751 = vmatpush2.bf16.msra.mxu0 0
        %1752 = vmatprep.subr.bf16.mxu0 0
        %1753 = vmatpush2.bf16.msra.mxu0 0
        %1754 = vmatprep.subr.bf16.mxu0 0
        %1755 = vmatpush2.bf16.msra.mxu0 0
        %1756 = vmatprep.subr.bf16.mxu0 0
        %1757 = vmatpush2.bf16.msra.mxu0 0
        %1758 = vmatprep.subr.bf16.mxu0 0
        %1759 = vmatpush2.bf16.msra.mxu0 0
        %1760 = vmatprep.subr.bf16.mxu0 0
        %1761 = vmatpush2.bf16.msra.mxu0 0
        %1762 = vmatprep.subr.bf16.mxu0 0
        %1763 = vmatpush2.bf16.msra.mxu0 0
        %1764 = vmatprep.mubr.bf16.mxu0 0
        %1765 = vmatmul.mubr.bf16.gmra.mxu0 %v1727
        %v1766 = vpop.f32.mrf.mxu0
        %v1767 = vadd.f32 0.0, %v1766
        %v1768 = vpop.f32.mrf.mxu0
        %v1769 = vpop.f32.mrf.mxu0
        %v1770 = vadd.f32 0.0, %v1769
        %v1771 = vpop.f32.mrf.mxu0
        %1772 = vdwg.mxu0
        %v1773 = vadd.f32 %v1502, %v1767
        %v1774 = vadd.f32 %v1503, %v1770
        %1775 = vrot.lane.b32.xlu0 %v942, 104
        %v1776 = vpop.permute.xlu0 %1775
        %1777 = vrot.lane.b32.xlu0 %v942, 72
        %v1778 = vpop.permute.xlu0 %1777
        %v1780 = vsel %vm959, %v1776, 0
        %v1783 = vsel %vm959, %v1778, 0
        %1785 = vmatprep.subr.bf16.mxu0 0
        %1786 = vmatpush1.bf16.xpose.msra.mxu0 0
        %1787 = vmatprep.subr.bf16.mxu0 0
        %1788 = vmatpush1.bf16.xpose.msra.mxu0 0
        %1789 = vmatprep.subr.bf16.mxu0 0
        %1790 = vmatpush1.bf16.xpose.msra.mxu0 0
        %1791 = vmatprep.subr.bf16.mxu0 0
        %1792 = vmatpush1.bf16.xpose.msra.mxu0 0
        %1793 = vmatprep.subr.bf16.mxu0 0
        %1794 = vmatpush1.bf16.xpose.msra.mxu0 0
        %1795 = vmatprep.subr.bf16.mxu0 0
        %1796 = vmatpush1.bf16.xpose.msra.mxu0 0
        %1797 = vmatprep.subr.bf16.mxu0 0
        %1798 = vmatpush1.bf16.xpose.msra.mxu0 0
        %1799 = vmatprep.subr.bf16.mxu0 0
        %1800 = vmatpush1.bf16.xpose.msra.mxu0 %v1783
        %1801 = vmatprep.subr.bf16.mxu0 0
        %1802 = vmatpush2.bf16.xpose.msra.mxu0 0
        %1803 = vmatprep.subr.bf16.mxu0 0
        %1804 = vmatpush2.bf16.xpose.msra.mxu0 0
        %1805 = vmatprep.subr.bf16.mxu0 0
        %1806 = vmatpush2.bf16.xpose.msra.mxu0 0
        %1807 = vmatprep.subr.bf16.mxu0 0
        %1808 = vmatpush2.bf16.xpose.msra.mxu0 0
        %1809 = vmatprep.subr.bf16.mxu0 0
        %1810 = vmatpush2.bf16.xpose.msra.mxu0 0
        %1811 = vmatprep.subr.bf16.mxu0 0
        %1812 = vmatpush2.bf16.xpose.msra.mxu0 0
        %1813 = vmatprep.subr.bf16.mxu0 0
        %1814 = vmatpush2.bf16.xpose.msra.mxu0 0
        %1815 = vmatprep.subr.bf16.mxu0 0
        %1816 = vmatpush2.bf16.xpose.msra.mxu0 0
        %1817 = vmatprep.mubr.bf16.mxu0 0
        %1818 = vmatmul.mubr.bf16.gmra.mxu0 %v1780
        %v1819 = vpop.f32.mrf.mxu0
        %v1820 = vadd.f32 %v949, %v1819
        %v1821 = vpop.f32.mrf.mxu0
        %v1822 = vpop.f32.mrf.mxu0
        %v1823 = vpop.f32.mrf.mxu0
        %1824 = vdwg.mxu0
        %1825 = vrot.lane.b32.xlu0 %v943, 104
        %v1826 = vpop.permute.xlu0 %1825
        %1827 = vrot.lane.b32.xlu0 %v943, 72
        %v1828 = vpop.permute.xlu0 %1827
        %v1830 = vsel %vm959, %v1826, 0
        %v1833 = vsel %vm959, %v1828, 0
        %1835 = vmatprep.subr.bf16.mxu0 0
        %1836 = vmatpush1.bf16.xpose.msra.mxu0 0
        %1837 = vmatprep.subr.bf16.mxu0 0
        %1838 = vmatpush1.bf16.xpose.msra.mxu0 0
        %1839 = vmatprep.subr.bf16.mxu0 0
        %1840 = vmatpush1.bf16.xpose.msra.mxu0 0
        %1841 = vmatprep.subr.bf16.mxu0 0
        %1842 = vmatpush1.bf16.xpose.msra.mxu0 0
        %1843 = vmatprep.subr.bf16.mxu0 0
        %1844 = vmatpush1.bf16.xpose.msra.mxu0 0
        %1845 = vmatprep.subr.bf16.mxu0 0
        %1846 = vmatpush1.bf16.xpose.msra.mxu0 0
        %1847 = vmatprep.subr.bf16.mxu0 0
        %1848 = vmatpush1.bf16.xpose.msra.mxu0 0
        %1849 = vmatprep.subr.bf16.mxu0 0
        %1850 = vmatpush1.bf16.xpose.msra.mxu0 %v1833
        %1851 = vmatprep.subr.bf16.mxu0 0
        %1852 = vmatpush2.bf16.xpose.msra.mxu0 0
        %1853 = vmatprep.subr.bf16.mxu0 0
        %1854 = vmatpush2.bf16.xpose.msra.mxu0 0
        %1855 = vmatprep.subr.bf16.mxu0 0
        %1856 = vmatpush2.bf16.xpose.msra.mxu0 0
        %1857 = vmatprep.subr.bf16.mxu0 0
        %1858 = vmatpush2.bf16.xpose.msra.mxu0 0
        %1859 = vmatprep.subr.bf16.mxu0 0
        %1860 = vmatpush2.bf16.xpose.msra.mxu0 0
        %1861 = vmatprep.subr.bf16.mxu0 0
        %1862 = vmatpush2.bf16.xpose.msra.mxu0 0
        %1863 = vmatprep.subr.bf16.mxu0 0
        %1864 = vmatpush2.bf16.xpose.msra.mxu0 0
        %1865 = vmatprep.subr.bf16.mxu0 0
        %1866 = vmatpush2.bf16.xpose.msra.mxu0 0
        %1867 = vmatprep.mubr.bf16.mxu0 0
        %1868 = vmatmul.mubr.bf16.gmra.mxu0 %v1830
        %v1869 = vpop.f32.mrf.mxu0
        %v1870 = vadd.f32 %v953, %v1869
        %v1871 = vpop.f32.mrf.mxu0
        %v1872 = vpop.f32.mrf.mxu0
        %v1873 = vpop.f32.mrf.mxu0
        %1874 = vdwg.mxu0
        %v1875 = vsel %vm959, %v1820, -inf
        %1876 = vmax.xlane.f32.xlu0 %v1875
        %v1877 = vpop.xlane.xlu0 %1876
        %v1878 = vsel %vm959, %v1870, -inf
        %1879 = vmax.xlane.f32.xlu0 %v1878
        %v1880 = vpop.xlane.xlu0 %1879
        %v1881 = vsub.f32 %v1820, %v1877
        %v1882 = vsub.f32 %v1870, %v1880
        %v1883 = vmul.f32 %v1881, 1.442695
        %v1884 = vpow.pop %v1883
        %v1885 = vmul.f32 %v1882, 1.442695
        %v1886 = vpow.pop %v1885
        %v1887 = vsel %vm959, %v1884, 0.0
        %1888 = vadd.xlane.f32.xlu0 %v1887
        %v1889 = vpop.xlane.xlu0 %1888
        %v1890 = vsel %vm959, %v1886, 0.0
        %1891 = vadd.xlane.f32.xlu0 %v1890
        %v1892 = vpop.xlane.xlu0 %1891
        %v1893 = vrcp.pop %v1889
        %v1894 = vrcp.pop %v1892
        %v1895 = vmul.f32 %v1884, %v1893
        %v1896 = vmul.f32 %v1886, %v1894
        %v1897 = vpack.c.bf16 %v1895, %v1895
        %v1898 = vpack.c.bf16 %v1896, %v1896
        %1899 = vrot.lane.b32.xlu0 %v942, 40
        %v1900 = vpop.permute.xlu0 %1899
        %v1902 = vsel %vm959, %v1897, 0
        %v1905 = vsel %vm1084, %v1900, 0
        %1907 = vmatprep.subr.bf16.mxu0 0
        %1908 = vmatpush1.bf16.msra.mxu0 0
        %1909 = vmatprep.subr.bf16.mxu0 0
        %1910 = vmatpush1.bf16.msra.mxu0 0
        %1911 = vmatprep.subr.bf16.mxu0 0
        %1912 = vmatpush1.bf16.msra.mxu0 0
        %1913 = vmatprep.subr.bf16.mxu0 0
        %1914 = vmatpush1.bf16.msra.mxu0 0
        %1915 = vmatprep.subr.bf16.mxu0 0
        %1916 = vmatpush1.bf16.msra.mxu0 0
        %1917 = vmatprep.subr.bf16.mxu0 0
        %1918 = vmatpush1.bf16.msra.mxu0 0
        %1919 = vmatprep.subr.bf16.mxu0 0
        %1920 = vmatpush1.bf16.msra.mxu0 0
        %1921 = vmatprep.subr.bf16.mxu0 0
        %1922 = vmatpush1.bf16.msra.mxu0 %v1905
        %1923 = vmatprep.subr.bf16.mxu0 0
        %1924 = vmatpush2.bf16.msra.mxu0 0
        %1925 = vmatprep.subr.bf16.mxu0 0
        %1926 = vmatpush2.bf16.msra.mxu0 0
        %1927 = vmatprep.subr.bf16.mxu0 0
        %1928 = vmatpush2.bf16.msra.mxu0 0
        %1929 = vmatprep.subr.bf16.mxu0 0
        %1930 = vmatpush2.bf16.msra.mxu0 0
        %1931 = vmatprep.subr.bf16.mxu0 0
        %1932 = vmatpush2.bf16.msra.mxu0 0
        %1933 = vmatprep.subr.bf16.mxu0 0
        %1934 = vmatpush2.bf16.msra.mxu0 0
        %1935 = vmatprep.subr.bf16.mxu0 0
        %1936 = vmatpush2.bf16.msra.mxu0 0
        %1937 = vmatprep.subr.bf16.mxu0 0
        %1938 = vmatpush2.bf16.msra.mxu0 0
        %1939 = vmatprep.mubr.bf16.mxu0 0
        %1940 = vmatmul.mubr.bf16.gmra.mxu0 %v1902
        %v1941 = vpop.f32.mrf.mxu0
        %v1942 = vadd.f32 0.0, %v1941
        %v1943 = vpop.f32.mrf.mxu0
        %v1944 = vpop.f32.mrf.mxu0
        %v1945 = vpop.f32.mrf.mxu0
        %1946 = vdwg.mxu0
        %1947 = vrot.lane.b32.xlu0 %v943, 40
        %v1948 = vpop.permute.xlu0 %1947
        %v1950 = vsel %vm959, %v1898, 0
        %v1953 = vsel %vm1084, %v1948, 0
        %1955 = vmatprep.subr.bf16.mxu0 0
        %1956 = vmatpush1.bf16.msra.mxu0 0
        %1957 = vmatprep.subr.bf16.mxu0 0
        %1958 = vmatpush1.bf16.msra.mxu0 0
        %1959 = vmatprep.subr.bf16.mxu0 0
        %1960 = vmatpush1.bf16.msra.mxu0 0
        %1961 = vmatprep.subr.bf16.mxu0 0
        %1962 = vmatpush1.bf16.msra.mxu0 0
        %1963 = vmatprep.subr.bf16.mxu0 0
        %1964 = vmatpush1.bf16.msra.mxu0 0
        %1965 = vmatprep.subr.bf16.mxu0 0
        %1966 = vmatpush1.bf16.msra.mxu0 0
        %1967 = vmatprep.subr.bf16.mxu0 0
        %1968 = vmatpush1.bf16.msra.mxu0 0
        %1969 = vmatprep.subr.bf16.mxu0 0
        %1970 = vmatpush1.bf16.msra.mxu0 %v1953
        %1971 = vmatprep.subr.bf16.mxu0 0
        %1972 = vmatpush2.bf16.msra.mxu0 0
        %1973 = vmatprep.subr.bf16.mxu0 0
        %1974 = vmatpush2.bf16.msra.mxu0 0
        %1975 = vmatprep.subr.bf16.mxu0 0
        %1976 = vmatpush2.bf16.msra.mxu0 0
        %1977 = vmatprep.subr.bf16.mxu0 0
        %1978 = vmatpush2.bf16.msra.mxu0 0
        %1979 = vmatprep.subr.bf16.mxu0 0
        %1980 = vmatpush2.bf16.msra.mxu0 0
        %1981 = vmatprep.subr.bf16.mxu0 0
        %1982 = vmatpush2.bf16.msra.mxu0 0
        %1983 = vmatprep.subr.bf16.mxu0 0
        %1984 = vmatpush2.bf16.msra.mxu0 0
        %1985 = vmatprep.subr.bf16.mxu0 0
        %1986 = vmatpush2.bf16.msra.mxu0 0
        %1987 = vmatprep.mubr.bf16.mxu0 0
        %1988 = vmatmul.mubr.bf16.gmra.mxu0 %v1950
        %v1989 = vpop.f32.mrf.mxu0
        %v1990 = vadd.f32 0.0, %v1989
        %v1991 = vpop.f32.mrf.mxu0
        %v1992 = vpop.f32.mrf.mxu0
        %v1993 = vpop.f32.mrf.mxu0
        %1994 = vdwg.mxu0
        %v1995 = vpack.c.bf16 %v1990, %v1942
        %v1996 = vld [vmem:[%s785 + $0xc] sm:$0xf]
        %v1998 = vsel %vm959, %v1995, 0
        %v2001 = vsel %vm1084, %v1996, 0
        %2003 = vmatprep.subr.bf16.mxu0 0
        %2004 = vmatpush1.bf16.msra.mxu0 0
        %2005 = vmatprep.subr.bf16.mxu0 0
        %2006 = vmatpush1.bf16.msra.mxu0 0
        %2007 = vmatprep.subr.bf16.mxu0 0
        %2008 = vmatpush1.bf16.msra.mxu0 0
        %2009 = vmatprep.subr.bf16.mxu0 0
        %2010 = vmatpush1.bf16.msra.mxu0 0
        %2011 = vmatprep.subr.bf16.mxu0 0
        %2012 = vmatpush1.bf16.msra.mxu0 0
        %2013 = vmatprep.subr.bf16.mxu0 0
        %2014 = vmatpush1.bf16.msra.mxu0 0
        %2015 = vmatprep.subr.bf16.mxu0 0
        %2016 = vmatpush1.bf16.msra.mxu0 0
        %2017 = vmatprep.subr.bf16.mxu0 0
        %2018 = vmatpush1.bf16.msra.mxu0 %v2001
        %2019 = vmatprep.subr.bf16.mxu0 0
        %2020 = vmatpush2.bf16.msra.mxu0 0
        %2021 = vmatprep.subr.bf16.mxu0 0
        %2022 = vmatpush2.bf16.msra.mxu0 0
        %2023 = vmatprep.subr.bf16.mxu0 0
        %2024 = vmatpush2.bf16.msra.mxu0 0
        %2025 = vmatprep.subr.bf16.mxu0 0
        %2026 = vmatpush2.bf16.msra.mxu0 0
        %2027 = vmatprep.subr.bf16.mxu0 0
        %2028 = vmatpush2.bf16.msra.mxu0 0
        %2029 = vmatprep.subr.bf16.mxu0 0
        %2030 = vmatpush2.bf16.msra.mxu0 0
        %2031 = vmatprep.subr.bf16.mxu0 0
        %2032 = vmatpush2.bf16.msra.mxu0 0
        %2033 = vmatprep.subr.bf16.mxu0 0
        %2034 = vmatpush2.bf16.msra.mxu0 0
        %2035 = vmatprep.mubr.bf16.mxu0 0
        %2036 = vmatmul.mubr.bf16.gmra.mxu0 %v1998
        %v2037 = vpop.f32.mrf.mxu0
        %v2038 = vadd.f32 0.0, %v2037
        %v2039 = vpop.f32.mrf.mxu0
        %v2040 = vpop.f32.mrf.mxu0
        %v2041 = vadd.f32 0.0, %v2040
        %v2042 = vpop.f32.mrf.mxu0
        %2043 = vdwg.mxu0
        %v2044 = vadd.f32 %v1773, %v2038
        %v2045 = vadd.f32 %v1774, %v2041
        %v2046 = vadd.f32 %v2044, %v868
        %v2047 = vadd.f32 %v2045, %v869
        %v2048 = vld [vmem:[%s791] sm:$0x1]
        %v2049 = vld [vmem:[%s794] sm:$0x1]
        %v2050 = vsel %vm894, %v2046, 0.0
        %2051 = vadd.xlane.f32.xlu0 %v2050
        %v2052 = vpop.xlane.xlu0 %2051
        %v2053 = vsel %vm894, %v2047, 0.0
        %2054 = vadd.xlane.f32.xlu0 %v2053
        %v2055 = vpop.xlane.xlu0 %2054
        %v2056 = vrcp.pop 32.0
        %v2057 = vmul.f32 %v2052, %v2056
        %v2058 = vmul.f32 %v2055, %v2056
        %v2059 = vsub.f32 %v2046, %v2057
        %v2060 = vsub.f32 %v2047, %v2058
        %v2061 = vmul.f32 %v2059, %v2059
        %v2062 = vmul.f32 %v2060, %v2060
        %v2063 = vsel %vm894, %v2061, 0.0
        %2064 = vadd.xlane.f32.xlu0 %v2063
        %v2065 = vpop.xlane.xlu0 %2064
        %v2066 = vsel %vm894, %v2062, 0.0
        %2067 = vadd.xlane.f32.xlu0 %v2066
        %v2068 = vpop.xlane.xlu0 %2067
        %v2069 = vmul.f32 %v2065, %v2056
        %v2070 = vmul.f32 %v2068, %v2056
        %v2071 = vadd.f32 %v2069, 1e-05
        %v2072 = vadd.f32 %v2070, 1e-05
        %v2073 = vrsqrt.pop %v2071
        %v2074 = vrsqrt.pop %v2072
        %v2075 = vmul.f32 %v2059, %v2073
        %v2076 = vmul.f32 %v2060, %v2074
        %v2078 = vlaneseq
        %v2079 = vshrl.u32 %v2078, 7
        %v2080 = vsub.s32 0, %v2079
        %v2081 = vrot.slane %v2048, %v2080
        %v2083 = vmul.f32 %v2075, %v2081
        %v2084 = vmul.f32 %v2076, %v2081
        %v2086 = vlaneseq
        %v2087 = vshrl.u32 %v2086, 7
        %v2088 = vsub.s32 0, %v2087
        %v2089 = vrot.slane %v2049, %v2088
        %v2091 = vadd.f32 %v2083, %v2089
        %v2092 = vadd.f32 %v2084, %v2089
        %v2093 = vpack.c.bf16 %v2092, %v2091
        %v2094 = vld [vmem:[%s668] sm:$0xf]
        %v2095 = vld [vmem:[%s668 + $0x4] sm:$0xf]
        %v2096 = vld [vmem:[%s668 + $0x8] sm:$0xf]
        %v2097 = vld [vmem:[%s668 + $0xc] sm:$0xf]
        %v2098 = vld [vmem:[%s797] sm:$0x1]
        %v2100 = vlaneseq
        %v2101 = vshrl.u32 %v2100, 7
        %v2102 = vsub.s32 0, %v2101
        %v2103 = vrot.slane %v2098, %v2102
        %v2109 = vunpack.c.l.b16 %v2094
        %v2110 = vunpack.c.l.b16 %v2095
        %v2111 = vunpack.c.l.b16 %v2096
        %v2112 = vunpack.c.l.b16 %v2097
        %v2113 = vpack.c.b16 %v2110, %v2109
        %v2114 = vpack.c.b16 %v2112, %v2111
        %v2118 = vsel %vm894, %v2093, 0
        %2120 = vmatprep.subr.bf16.mxu0 0
        %2121 = vmatpush1.bf16.msra.mxu0 0
        %2122 = vmatprep.subr.bf16.mxu0 0
        %2123 = vmatpush1.bf16.msra.mxu0 0
        %2124 = vmatprep.subr.bf16.mxu0 0
        %2125 = vmatpush1.bf16.msra.mxu0 0
        %2126 = vmatprep.subr.bf16.mxu0 0
        %2127 = vmatpush1.bf16.msra.mxu0 0
        %2128 = vmatprep.subr.bf16.mxu0 0
        %2129 = vmatpush1.bf16.msra.mxu0 0
        %2130 = vmatprep.subr.bf16.mxu0 0
        %2131 = vmatpush1.bf16.msra.mxu0 0
        %2132 = vmatprep.subr.bf16.mxu0 0
        %2133 = vmatpush1.bf16.msra.mxu0 %v2114
        %2134 = vmatprep.subr.bf16.mxu0 0
        %2135 = vmatpush1.bf16.msra.mxu0 %v2113
        %2136 = vmatprep.subr.bf16.mxu0 0
        %2137 = vmatpush2.bf16.msra.mxu0 0
        %2138 = vmatprep.subr.bf16.mxu0 0
        %2139 = vmatpush2.bf16.msra.mxu0 0
        %2140 = vmatprep.subr.bf16.mxu0 0
        %2141 = vmatpush2.bf16.msra.mxu0 0
        %2142 = vmatprep.subr.bf16.mxu0 0
        %2143 = vmatpush2.bf16.msra.mxu0 0
        %2144 = vmatprep.subr.bf16.mxu0 0
        %2145 = vmatpush2.bf16.msra.mxu0 0
        %2146 = vmatprep.subr.bf16.mxu0 0
        %2147 = vmatpush2.bf16.msra.mxu0 0
        %2148 = vmatprep.subr.bf16.mxu0 0
        %2149 = vmatpush2.bf16.msra.mxu0 0
        %2150 = vmatprep.subr.bf16.mxu0 0
        %2151 = vmatpush2.bf16.msra.mxu0 0
        %2152 = vmatprep.mubr.bf16.mxu0 0
        %2153 = vmatmul.mubr.bf16.gmra.mxu0 %v2118
        %v2154 = vpop.f32.mrf.mxu0
        %v2155 = vadd.f32 %v2103, %v2154
        %v2156 = vpop.f32.mrf.mxu0
        %v2157 = vpop.f32.mrf.mxu0
        %v2158 = vadd.f32 %v2103, %v2157
        %v2159 = vpop.f32.mrf.mxu0
        %2160 = vdwg.mxu0
        %v2161 = vmul.f32 %v2155, 0.5
        %v2162 = vmul.f32 %v2158, 0.5
        %v2163 = vmul.f32 %v2155, 0.044715
        %v2164 = vmul.f32 %v2158, 0.044715
        %v2165 = vmul.f32 %v2163, %v2155
        %v2166 = vmul.f32 %v2164, %v2158
        %v2167 = vmul.f32 %v2165, %v2155
        %v2168 = vmul.f32 %v2166, %v2158
        %v2169 = vadd.f32 %v2155, %v2167
        %v2170 = vadd.f32 %v2158, %v2168
        %v2171 = vmul.f32 %v2169, 0.7978846
        %v2172 = vmul.f32 %v2170, 0.7978846
        %v2173 = vtanh.pop %v2171
        %v2174 = vtanh.pop %v2172
        %v2175 = vadd.f32 %v2173, 1.0
        %v2176 = vadd.f32 %v2174, 1.0
        %v2177 = vmul.f32 %v2161, %v2175
        %v2178 = vmul.f32 %v2162, %v2176
        %v2179 = vpack.c.bf16 %v2178, %v2177
        %v2180 = vld [vmem:[%s802] sm:$0xf]
        %v2181 = vld [vmem:[%s802 + $0x4] sm:$0xf]
        %v2182 = vld [vmem:[%s802 + $0x8] sm:$0xf]
        %v2183 = vld [vmem:[%s802 + $0xc] sm:$0xf]
        %v2184 = vld [vmem:[%s802 + $0x10] sm:$0xf]
        %v2185 = vld [vmem:[%s802 + $0x14] sm:$0xf]
        %v2186 = vld [vmem:[%s802 + $0x18] sm:$0xf]
        %v2187 = vld [vmem:[%s802 + $0x1c] sm:$0xf]
        %v2188 = vld [vmem:[%s805] sm:$0x1]
        %v2190 = vlaneseq
        %v2191 = vshrl.u32 %v2190, 7
        %v2192 = vsub.s32 0, %v2191
        %v2193 = vrot.slane %v2188, %v2192
        %v2203 = vunpack.c.l.b16 %v2180
        %v2204 = vunpack.c.l.b16 %v2181
        %v2205 = vunpack.c.l.b16 %v2182
        %v2206 = vunpack.c.l.b16 %v2183
        %v2207 = vunpack.c.l.b16 %v2184
        %v2208 = vunpack.c.l.b16 %v2185
        %v2209 = vunpack.c.l.b16 %v2186
        %v2210 = vunpack.c.l.b16 %v2187
        %v2211 = vpack.c.b16 %v2204, %v2203
        %v2212 = vpack.c.b16 %v2206, %v2205
        %v2213 = vpack.c.b16 %v2208, %v2207
        %v2214 = vpack.c.b16 %v2210, %v2209
        %vm2219 = vcmask 523264
        %v2221 = vsel %vm2219, %v2179, 0
        %2223 = vmatprep.subr.bf16.mxu0 0
        %2224 = vmatpush1.bf16.msra.mxu0 0
        %2225 = vmatprep.subr.bf16.mxu0 0
        %2226 = vmatpush1.bf16.msra.mxu0 0
        %2227 = vmatprep.subr.bf16.mxu0 0
        %2228 = vmatpush1.bf16.msra.mxu0 0
        %2229 = vmatprep.subr.bf16.mxu0 0
        %2230 = vmatpush1.bf16.msra.mxu0 0
        %2231 = vmatprep.subr.bf16.mxu0 0
        %2232 = vmatpush1.bf16.msra.mxu0 %v2214
        %2233 = vmatprep.subr.bf16.mxu0 0
        %2234 = vmatpush1.bf16.msra.mxu0 %v2213
        %2235 = vmatprep.subr.bf16.mxu0 0
        %2236 = vmatpush1.bf16.msra.mxu0 %v2212
        %2237 = vmatprep.subr.bf16.mxu0 0
        %2238 = vmatpush1.bf16.msra.mxu0 %v2211
        %2239 = vmatprep.subr.bf16.mxu0 0
        %2240 = vmatpush2.bf16.msra.mxu0 0
        %2241 = vmatprep.subr.bf16.mxu0 0
        %2242 = vmatpush2.bf16.msra.mxu0 0
        %2243 = vmatprep.subr.bf16.mxu0 0
        %2244 = vmatpush2.bf16.msra.mxu0 0
        %2245 = vmatprep.subr.bf16.mxu0 0
        %2246 = vmatpush2.bf16.msra.mxu0 0
        %2247 = vmatprep.subr.bf16.mxu0 0
        %2248 = vmatpush2.bf16.msra.mxu0 0
        %2249 = vmatprep.subr.bf16.mxu0 0
        %2250 = vmatpush2.bf16.msra.mxu0 0
        %2251 = vmatprep.subr.bf16.mxu0 0
        %2252 = vmatpush2.bf16.msra.mxu0 0
        %2253 = vmatprep.subr.bf16.mxu0 0
        %2254 = vmatpush2.bf16.msra.mxu0 0
        %2255 = vmatprep.mubr.bf16.mxu0 0
        %2256 = vmatmul.mubr.bf16.gmra.mxu0 %v2221
        %v2257 = vpop.f32.mrf.mxu0
        %v2258 = vadd.f32 %v2193, %v2257
        %v2259 = vpop.f32.mrf.mxu0
        %v2260 = vpop.f32.mrf.mxu0
        %v2261 = vadd.f32 %v2193, %v2260
        %v2262 = vpop.f32.mrf.mxu0
        %2263 = vdwg.mxu0
        %v2264 = vadd.f32 %v2258, %v2091
        %v2265 = vadd.f32 %v2261, %v2092
        %v2266 = vld [vmem:[%s808] sm:$0x1]
        %v2267 = vld [vmem:[%s811] sm:$0x1]
        %v2268 = vsel %vm894, %v2264, 0.0
        %2269 = vadd.xlane.f32.xlu0 %v2268
        %v2270 = vpop.xlane.xlu0 %2269
        %v2271 = vsel %vm894, %v2265, 0.0
        %2272 = vadd.xlane.f32.xlu0 %v2271
        %v2273 = vpop.xlane.xlu0 %2272
        %v2274 = vmul.f32 %v2270, %v2056
        %v2275 = vmul.f32 %v2273, %v2056
        %v2276 = vsub.f32 %v2264, %v2274
        %v2277 = vsub.f32 %v2265, %v2275
        %v2278 = vmul.f32 %v2276, %v2276
        %v2279 = vmul.f32 %v2277, %v2277
        %v2280 = vsel %vm894, %v2278, 0.0
        %2281 = vadd.xlane.f32.xlu0 %v2280
        %v2282 = vpop.xlane.xlu0 %2281
        %v2283 = vsel %vm894, %v2279, 0.0
        %2284 = vadd.xlane.f32.xlu0 %v2283
        %v2285 = vpop.xlane.xlu0 %2284
        %v2286 = vmul.f32 %v2282, %v2056
        %v2287 = vmul.f32 %v2285, %v2056
        %v2288 = vadd.f32 %v2286, 1e-05
        %v2289 = vadd.f32 %v2287, 1e-05
        %v2290 = vrsqrt.pop %v2288
        %v2291 = vrsqrt.pop %v2289
        %v2292 = vmul.f32 %v2276, %v2290
        %v2293 = vmul.f32 %v2277, %v2291
        %v2295 = vlaneseq
        %v2296 = vshrl.u32 %v2295, 7
        %v2297 = vsub.s32 0, %v2296
        %v2298 = vrot.slane %v2266, %v2297
        %v2300 = vmul.f32 %v2292, %v2298
        %v2301 = vmul.f32 %v2293, %v2298
        %v2303 = vlaneseq
        %v2304 = vshrl.u32 %v2303, 7
        %v2305 = vsub.s32 0, %v2304
        %v2306 = vrot.slane %v2267, %v2305
        %v2308 = vadd.f32 %v2300, %v2306
        %v2309 = vadd.f32 %v2301, %v2306
        %2310 = vst.msk [vmem:[#allocation2] sm:$0xff] %vm894, %v2308
        %2311 = vst.msk [vmem:[#allocation2 + $0x8] sm:$0xff] %vm894, %v2309
        %p2312 = scmp.eq.s32.totalorder %s42, 1
        // Predicated region
        $region105: #{tpu_custom_call.1} parent=83 // pred_check
          %p2313 = pneg %p2312
        $region106: #{tpu_custom_call.1} parent=83 // pred_check_branch
          %2315 = sbr.rel (%p2313) target = $region108
        $region107: #{tpu_custom_call.1} parent=83 // pred_region
          %v2316 = vsel %vm894, %v2308, 0.0
          %v2317 = vrot.slane %v2316, 4
          %v2318 = vadd.f32 %v2316, %v2317
          %v2319 = vrot.slane %v2318, 2
          %v2320 = vadd.f32 %v2318, %v2319
          %v2321 = vrot.slane %v2320, 1
          %v2322 = vadd.f32 %v2320, %v2321
          %v2323 = vsel %vm894, %v2309, 0.0
          %v2324 = vrot.slane %v2323, 4
          %v2325 = vadd.f32 %v2323, %v2324
          %v2326 = vrot.slane %v2325, 2
          %v2327 = vadd.f32 %v2325, %v2326
          %v2328 = vrot.slane %v2327, 1
          %v2329 = vadd.f32 %v2327, %v2328
          %v2330 = vrcp.pop 8.0
          %v2331 = vmul.f32 %v2322, %v2330
          %v2332 = vmul.f32 %v2329, %v2330
          %vm2333 = vcmask 253952
          %2334 = vst.msk [vmem:[%s765] sm:$0x1] %vm2333, %v2331
          %2335 = vst.msk [vmem:[%s765 + $0x1] sm:$0x1] %vm2333, %v2332
        $region108: #{tpu_custom_call.1} parent=83 // pred_fallthru
          _
        %s2336 = sand.u32 %s463, 1
        %s2337 = scalar_lea.sflag [#allocation5], %s2336
        %s2338 = sand.u32 %s463, 1
        %s2339 = smul.addr %s2338, 2
        %s2340 = scalar_lea.vmem [#allocation11], %s2339
        // Predicated region
        $region109: #{tpu_custom_call.1} parent=83 // pred_check
          %p2341 = pneg %p473
        $region110: #{tpu_custom_call.1} parent=83 // pred_check_branch
          %2343 = sbr.rel (%p2341) target = $region112
        $region111: #{tpu_custom_call.1} parent=83 // pred_region
          %s2344 = smul.u32 2, %s41
          %s2346 = ssub.s32 32, 32
          %2347 = vsyncadd %s2337, %s2346
          %s2348 = smul.addr %s2344, 16
          %s2349 = scalar_lea.hbm %s16, %s2348
          %s2350 = sshll.u32 %s2340, 4
          %s2351 = int_to_ptr.vmem [resolvable:$true] %s2350
          %2356 = dma.vmem_to_hbm [thread:$0]  %s2351, 32, %s2349, %s2337, 16, 16, 1
        $region112: #{tpu_custom_call.1} parent=83 // pred_fallthru
          _
      $region84: #{tpu_custom_call.1} parent=5 // pred_fallthru
        _
      %p2357 = scmp.le.s32.totalorder 2, %s32
      // Predicated region
      $region113: #{tpu_custom_call.1} parent=5 // pred_check
        %p2358 = pneg %p2357
      $region114: #{tpu_custom_call.1} parent=5 // pred_check_branch
        %2360 = sbr.rel (%p2358) target = $region116
      $region115: #{tpu_custom_call.1} parent=5 // pred_region
        %s2361 = ssub.s32 %s32, 2
        // Predicated region
        $region117: #{tpu_custom_call.1} parent=115 // pred_check
          %p2362 = pneg %p479
        $region118: #{tpu_custom_call.1} parent=115 // pred_check_branch
          %2364 = sbr.rel (%p2362) target = $region120
        $region119: #{tpu_custom_call.1} parent=115 // pred_region
          %s2365 = sand.u32 %s464, 1
          %s2366 = scalar_lea.sflag [#allocation5], %s2365
          %s2367 = sand.u32 %s464, 1
          %s2368 = smul.addr %s2367, 2
          %s2369 = scalar_lea.vmem [#allocation11], %s2368
          %2370 = dma.done %s2366, 32
        $region120: #{tpu_custom_call.1} parent=115 // pred_fallthru
          _
      $region116: #{tpu_custom_call.1} parent=5 // pred_fallthru
        _
    $region6: #{tpu_custom_call.1} parent=1 // loop_footer
      %s36 = sadd.s32 1, %s32
    $region7: #{tpu_custom_call.1} parent=1 // loop_footer_branch
      %31 = sbr.rel target = $region3
    $region8: #{tpu_custom_call.1} parent=1 // loop_exit
      _
    %2371 = vsyncpa [#allocation4], 1
    %s2372 = scalar_lea.sflag [#allocation4], 1
    %2373 = vsyncpa %s2372, 1
    %2374 = vsyncpa [#allocation7], 1
    %2375 = vsyncpa [#allocation10], 1
    %s2376 = scalar_lea.sflag [#allocation10], 1
    %2377 = vsyncpa %s2376, 1
    %2378 = vsyncpa [#allocation5], 1
    %s2379 = scalar_lea.sflag [#allocation5], 1
    %2380 = vsyncpa %s2379, 1

</llo_original>
